<compile_context>
chip_gen: v6e
topology: v6e:2x2x1
jax: 0.10.0
libtpu: 0.0.40
codegen_flags: <defaults>
</compile_context>

<pallas_src>
import functools
import math

import jax
import jax.numpy as jnp
from jax import lax
from jax.experimental import pallas as pl
from jax.experimental.pallas import tpu as pltpu


def _round_up(x, m):
    return ((x + m - 1) // m) * m


# --------------------------------------------------------------------------- #
# Static geometry per residual block.
# --------------------------------------------------------------------------- #
def _block_geometry(H, W, P, K):
    """Flattened-lane shifts for conv1/conv2 taps + conv1-output valid region."""
    pad1 = K // 2
    pad2 = (K - 1) // 2
    Wg = W + 2 * P
    H1 = H + pad1 - pad2          # conv1 output height (PyTorch semantics)
    W1 = W + pad1 - pad2
    # conv1: source (x / prev block output) sits at grid offset (P, P) with a
    # zero ring; conv1 output y1 is embedded at grid offset (pad2, pad2).
    shifts1 = tuple((kh + P - K + 1) * Wg + (kw + P - K + 1)
                    for kh in range(K) for kw in range(K))
    # conv2: reads y1 (at offset (pad2, pad2)); output sits at offset (P, P).
    shifts2 = tuple((kh - P) * Wg + (kw - P)
                    for kh in range(K) for kw in range(K))
    valid1 = (pad2, pad2 + H1, pad2, pad2 + W1)   # y1 valid rows/cols on grid
    return dict(K=K, shifts1=shifts1, shifts2=shifts2, valid1=valid1)


# --------------------------------------------------------------------------- #
# Fused kernel factory.
# --------------------------------------------------------------------------- #
def _build_kernel(n_blocks, Cp, Lp, M, Lext, cfgs):
    left_w = M                     # left lane margin of the scratch buffers
    right_w = Lext - M - Lp        # right lane margin

    def conv(src_ref, shifts, w_ref, b_ref):
        """One conv = im2col (sublane-stacked shifted windows) + ONE MXU dot."""
        cols = [src_ref[:, M + s:M + s + Lp] for s in shifts]        # (Cp, Lp) each
        patches = cols[0] if len(cols) == 1 else jnp.concatenate(cols, axis=0)
        y = jnp.dot(w_ref[...], patches, preferred_element_type=jnp.float32)
        return y + b_ref[...]                                        # (Cp,1) bias

    def kernel(*refs):
        x_ref = refs[0]
        img_ref = refs[1 + 5 * n_blocks]
        out_ref = refs[2 + 5 * n_blocks]
        carrier = refs[3 + 5 * n_blocks]    # residual carrier / conv1 source
        stage = refs[4 + 5 * n_blocks]      # staged conv1 output (y1)

        # Keep lane margins of the scratch buffers zero (shifted reads fall into
        # them). Dense 128-lane stores, redone each step so megacore grid splits
        # stay correct (program_id==0 never runs on the second core).
        zl = jnp.zeros((Cp, left_w), jnp.float32)
        carrier[:, 0:left_w] = zl
        stage[:, 0:left_w] = zl
        if right_w > 0:
            zr = jnp.zeros((Cp, right_w), jnp.float32)
            carrier[:, M + Lp:Lext] = zr
            stage[:, M + Lp:Lext] = zr

        img = img_ref[...]                                  # (1, Lp) image mask
        xv = x_ref[...]                                     # (Cp, Lp)
        carrier[:, M:M + Lp] = xv                           # 128-aligned, dense
        prev = xv
        for i, cfg in enumerate(cfgs):
            w1, b1, w2, b2, v1 = refs[1 + 5 * i:6 + 5 * i]

            # conv1 -> bias -> leaky_relu(0.01) -> mask to conv1's valid region.
            y1 = conv(carrier, cfg["shifts1"], w1, b1)
            y1 = jnp.maximum(y1, 0.01 * y1) * v1[...]
            stage[:, M:M + Lp] = y1                         # dense, aligned

            # conv2 -> bias -> mask to image region -> residual add.
            y2 = conv(stage, cfg["shifts2"], w2, b2)
            o = y2 * img + prev
            out_ref[i * Cp:(i + 1) * Cp, :] = o             # lane-dense store
            if i + 1 < n_blocks:
                carrier[:, M:M + Lp] = o                    # next block's input
            prev = o

    return kernel


# --------------------------------------------------------------------------- #
# Public wrapper: NCHW in, NCHW out (torch.cat(out, 1) semantics).
# --------------------------------------------------------------------------- #
def channel_increase_block(x, params, kernel_sizes):
    """x: (N, C, H, W) f32; params: [(w1 OIHW, b1, w2 OIHW, b2)] per block."""
    N, C, H, W = x.shape
    n_blocks = len(params)
    P = max(K // 2 for K in kernel_sizes)
    Hg, Wg = H + 2 * P, W + 2 * P
    L = Hg * Wg
    Lp = _round_up(L, 128)                 # lane-dense compute/store width
    Cp = _round_up(C, 8)

    cfgs = [_block_geometry(H, W, P, K) for K in kernel_sizes]

    all_shifts = [s for c in cfgs for s in (c["shifts1"] + c["shifts2"])]
    max_pos = max(max(all_shifts), 0)
    max_neg = max(-min(all_shifts), 0)
    M = _round_up(max(max_neg, 1), 128)    # 128-aligned left margin (scratch only)
    Lext = _round_up(M + Lp + max_pos, 128)

    # ---- input: embedded on the zero-padded grid, lanes padded to Lp ----
    xg = jnp.pad(x, ((0, 0), (0, Cp - C), (P, P), (P, P))).reshape(N, Cp, L)
    x_in = jnp.pad(xg, ((0, 0), (0, 0), (0, Lp - L)))

    # ---- {0,1} masks over the flattened grid (compile-time constants) ----
    gr = jnp.arange(Lp, dtype=jnp.int32) // Wg
    gc = jnp.arange(Lp, dtype=jnp.int32) % Wg

    def region_mask(r0, r1, c0, c1):
        m = (gr >= r0) & (gr < r1) & (gc >= c0) & (gc < c1)
        return m.astype(jnp.float32).reshape(1, Lp)

    img_mask = region_mask(P, P + H, P, P + W)

    inputs = [x_in]
    in_specs = [pl.BlockSpec((None, Cp, Lp), lambda n: (n, 0, 0))]
    for (w1, b1, w2, b2), K, cfg in zip(params, kernel_sizes, cfgs):
        KK = K * K

        def prep_w(w, KK=KK):
            # OIHW (C,C,K,K) -> (Cp, KK*Cp), column = (kh*K+kw)*Cp + c_in.
            wp = jnp.pad(w, ((0, Cp - C), (0, Cp - C), (0, 0), (0, 0)))
            return jnp.transpose(wp, (0, 2, 3, 1)).reshape(Cp, KK * Cp)

        def prep_b(b):
            return jnp.pad(b, (0, Cp - C)).reshape(Cp, 1)

        r0, r1, c0, c1 = cfg["valid1"]
        inputs += [prep_w(w1), prep_b(b1), prep_w(w2), prep_b(b2),
                   region_mask(r0, r1, c0, c1)]
        in_specs += [
            pl.BlockSpec((Cp, KK * Cp), lambda n: (0, 0)),
            pl.BlockSpec((Cp, 1), lambda n: (0, 0)),
            pl.BlockSpec((Cp, KK * Cp), lambda n: (0, 0)),
            pl.BlockSpec((Cp, 1), lambda n: (0, 0)),
            pl.BlockSpec((1, Lp), lambda n: (0, 0)),
        ]
    inputs.append(img_mask)
    in_specs.append(pl.BlockSpec((1, Lp), lambda n: (0, 0)))

    kernel = _build_kernel(n_blocks, Cp, Lp, M, Lext, cfgs)

    out_flat = pl.pallas_call(
        kernel,
        out_shape=jax.ShapeDtypeStruct((N, n_blocks * Cp, Lp), jnp.float32),
        grid=(N,),
        in_specs=in_specs,
        out_specs=pl.BlockSpec((None, n_blocks * Cp, Lp), lambda n: (n, 0, 0)),
        scratch_shapes=[pltpu.VMEM((Cp, Lext), jnp.float32),   # residual carrier
                        pltpu.VMEM((Cp, Lext), jnp.float32)],  # y1 staging
        compiler_params=pltpu.CompilerParams(
            dimension_semantics=("parallel",),
            vmem_limit_bytes=32 * 1024 * 1024),
    )(*inputs)

    # Un-embed: drop padded lanes/channels and the zero ring -> NCHW concat.
    out = out_flat[:, :, :L].reshape(N, n_blocks, Cp, Hg, Wg)
    out = out[:, :, :C, P:P + H, P:P + W].reshape(N, n_blocks * C, H, W)
    return out


# ----------------------- pure-JAX reference (verification) -----------------------
def _ref_residual_block(x, w1, b1, w2, b2, K):
    pad1, pad2 = K // 2, (K - 1) // 2
    dn = ("NCHW", "OIHW", "NCHW")
    y = lax.conv_general_dilated(x, w1, (1, 1), [(pad1, pad1), (pad1, pad1)],
                                 dimension_numbers=dn) + b1.reshape(1, -1, 1, 1)
    y = jnp.where(y >= 0.0, y, 0.01 * y)                 # F.leaky_relu default slope
    y = lax.conv_general_dilated(y, w2, (1, 1), [(pad2, pad2), (pad2, pad2)],
                                 dimension_numbers=dn) + b2.reshape(1, -1, 1, 1)
    return x + y


def _ref_channel_increase(x, params, kernel_sizes):
    outs = []
    for (w1, b1, w2, b2), K in zip(params, kernel_sizes):
        x = _ref_residual_block(x, w1, b1, w2, b2, K)
        outs.append(x)
    return jnp.concatenate(outs, axis=1)


# ----------------------- deterministic parameter init -----------------------
def init_params(key, blocks, base_channel):
    """kaiming_normal_(a=0, fan_in) * 0.1, zero bias — matches initialize_weights(..., 0.1)."""
    params, ksizes = [], []
    C = base_channel
    for name in blocks:
        K = {"res2": 2, "res3": 3}[name]
        fan_in = C * K * K
        std = math.sqrt(2.0 / fan_in) * 0.1
        key, k1, k2 = jax.random.split(key, 3)
        w1 = jax.random.normal(k1, (C, C, K, K), jnp.float32) * std   # OIHW (torch layout)
        w2 = jax.random.normal(k2, (C, C, K, K), jnp.float32) * std
        b1 = jnp.zeros((C,), jnp.float32)
        b2 = jnp.zeros((C,), jnp.float32)
        params.append((w1, b1, w2, b2))
        ksizes.append(K)
    return params, ksizes


if __name__ == "__main__":
    blocks = ("res2", "res3")
    base_channel = 4
    N, H, W = 2, 16, 16

    key = jax.random.PRNGKey(0)
    key, kx = jax.random.split(key)
    x = jax.random.normal(kx, (N, base_channel, H, W), jnp.float32)   # NCHW like PyTorch

    params, kernel_sizes = init_params(key, blocks, base_channel)

    fwd = jax.jit(functools.partial(channel_increase_block,
                                    kernel_sizes=tuple(kernel_sizes)))
    out = jax.block_until_ready(fwd(x, params))

    ref = jax.block_until_ready(_ref_channel_increase(x, params, kernel_sizes))
    assert out.shape == (N, base_channel * len(blocks), H, W)
    err = float(jnp.max(jnp.abs(out - ref)))
    assert err < 1e-4, err

    print("KERNEL_OK")
</pallas_src>

<mosaic_0001>
module attributes {stable_mosaic.version = 11 : i64} {
  func.func @kernel(%arg0: i32, %arg1: memref<1x8x384xf32, #tpu.memory_space<vmem>>, %arg2: memref<8x32xf32, #tpu.memory_space<vmem>>, %arg3: memref<8x1xf32, #tpu.memory_space<vmem>>, %arg4: memref<8x32xf32, #tpu.memory_space<vmem>>, %arg5: memref<8x1xf32, #tpu.memory_space<vmem>>, %arg6: memref<1x384xf32, #tpu.memory_space<vmem>>, %arg7: memref<8x72xf32, #tpu.memory_space<vmem>>, %arg8: memref<8x1xf32, #tpu.memory_space<vmem>>, %arg9: memref<8x72xf32, #tpu.memory_space<vmem>>, %arg10: memref<8x1xf32, #tpu.memory_space<vmem>>, %arg11: memref<1x384xf32, #tpu.memory_space<vmem>>, %arg12: memref<1x384xf32, #tpu.memory_space<vmem>>, %arg13: memref<1x16x384xf32, #tpu.memory_space<vmem>>, %arg14: memref<8x640xf32, #tpu.memory_space<vmem>>, %arg15: memref<8x640xf32, #tpu.memory_space<vmem>>) attributes {dimension_semantics = [#tpu.dimension_semantics<parallel>], iteration_bounds = array<i64: 2>, scalar_prefetch = 0 : i64, scratch_operands = 2 : i64, tpu.core_type = #tpu.core_type<tc>, window_params = [{transform_indices = @transform_0, window_bounds = array<i64: 1, 8, 384>}, {pipeline_mode = #tpu.pipeline_mode<synchronous>, transform_indices = @transform_1, window_bounds = array<i64: 8, 32>}, {pipeline_mode = #tpu.pipeline_mode<synchronous>, transform_indices = @transform_2, window_bounds = array<i64: 8, 1>}, {pipeline_mode = #tpu.pipeline_mode<synchronous>, transform_indices = @transform_3, window_bounds = array<i64: 8, 32>}, {pipeline_mode = #tpu.pipeline_mode<synchronous>, transform_indices = @transform_4, window_bounds = array<i64: 8, 1>}, {pipeline_mode = #tpu.pipeline_mode<synchronous>, transform_indices = @transform_5, window_bounds = array<i64: 1, 384>}, {pipeline_mode = #tpu.pipeline_mode<synchronous>, transform_indices = @transform_6, window_bounds = array<i64: 8, 72>}, {pipeline_mode = #tpu.pipeline_mode<synchronous>, transform_indices = @transform_7, window_bounds = array<i64: 8, 1>}, {pipeline_mode = #tpu.pipeline_mode<synchronous>, transform_indices = @transform_8, window_bounds = array<i64: 8, 72>}, {pipeline_mode = #tpu.pipeline_mode<synchronous>, transform_indices = @transform_9, window_bounds = array<i64: 8, 1>}, {pipeline_mode = #tpu.pipeline_mode<synchronous>, transform_indices = @transform_10, window_bounds = array<i64: 1, 384>}, {pipeline_mode = #tpu.pipeline_mode<synchronous>, transform_indices = @transform_11, window_bounds = array<i64: 1, 384>}, {transform_indices = @transform_12, window_bounds = array<i64: 1, 16, 384>}]} {
    %cst = arith.constant 0.000000e+00 : f32
    %0 = vector.broadcast %cst : f32 to vector<8x128xf32>
    %c0 = arith.constant 0 : index
    %c0_0 = arith.constant 0 : index
    %1 = vector.load %arg14[%c0, %c0_0] : memref<8x640xf32, #tpu.memory_space<vmem>>, vector<8x128xf32>
    tpu.vector_store %arg14[%c0, %c0_0], %0 {strides = array<i32>} : memref<8x640xf32, #tpu.memory_space<vmem>>, vector<8x128xf32>,
    %c0_1 = arith.constant 0 : index
    %c0_2 = arith.constant 0 : index
    %2 = vector.load %arg15[%c0_1, %c0_2] : memref<8x640xf32, #tpu.memory_space<vmem>>, vector<8x128xf32>
    tpu.vector_store %arg15[%c0_1, %c0_2], %0 {strides = array<i32>} : memref<8x640xf32, #tpu.memory_space<vmem>>, vector<8x128xf32>,
    %cst_3 = arith.constant 0.000000e+00 : f32
    %3 = vector.broadcast %cst_3 : f32 to vector<8x128xf32>
    %c0_4 = arith.constant 0 : index
    %c512 = arith.constant 512 : index
    %4 = vector.load %arg14[%c0_4, %c512] : memref<8x640xf32, #tpu.memory_space<vmem>>, vector<8x128xf32>
    tpu.vector_store %arg14[%c0_4, %c512], %3 {strides = array<i32>} : memref<8x640xf32, #tpu.memory_space<vmem>>, vector<8x128xf32>,
    %c0_5 = arith.constant 0 : index
    %c512_6 = arith.constant 512 : index
    %5 = vector.load %arg15[%c0_5, %c512_6] : memref<8x640xf32, #tpu.memory_space<vmem>>, vector<8x128xf32>
    tpu.vector_store %arg15[%c0_5, %c512_6], %3 {strides = array<i32>} : memref<8x640xf32, #tpu.memory_space<vmem>>, vector<8x128xf32>,
    %c0_7 = arith.constant 0 : index
    %c0_8 = arith.constant 0 : index
    %6 = vector.load %arg12[%c0_7, %c0_8] : memref<1x384xf32, #tpu.memory_space<vmem>>, vector<1x384xf32>
    %c0_9 = arith.constant 0 : index
    %c0_10 = arith.constant 0 : index
    %c0_11 = arith.constant 0 : index
    %7 = vector.load %arg1[%c0_9, %c0_10, %c0_11] : memref<1x8x384xf32, #tpu.memory_space<vmem>>, vector<1x8x384xf32>
    %8 = vector.shape_cast %7 : vector<1x8x384xf32> to vector<8x384xf32>
    %c0_12 = arith.constant 0 : index
    %c128 = arith.constant 128 : index
    %9 = vector.load %arg14[%c0_12, %c128] : memref<8x640xf32, #tpu.memory_space<vmem>>, vector<8x384xf32>
    tpu.vector_store %arg14[%c0_12, %c128], %8 {strides = array<i32>} : memref<8x640xf32, #tpu.memory_space<vmem>>, vector<8x384xf32>,
    %c0_13 = arith.constant 0 : index
    %c128_14 = arith.constant 128 : index
    %10 = vector.load %arg14[%c0_13, %c128_14] : memref<8x640xf32, #tpu.memory_space<vmem>>, vector<8x384xf32>
    %c0_15 = arith.constant 0 : index
    %c129 = arith.constant 129 : index
    %11 = vector.load %arg14[%c0_15, %c129] : memref<8x640xf32, #tpu.memory_space<vmem>>, vector<8x384xf32>
    %c0_16 = arith.constant 0 : index
    %c146 = arith.constant 146 : index
    %12 = vector.load %arg14[%c0_16, %c146] : memref<8x640xf32, #tpu.memory_space<vmem>>, vector<8x384xf32>
    %c0_17 = arith.constant 0 : index
    %c147 = arith.constant 147 : index
    %13 = vector.load %arg14[%c0_17, %c147] : memref<8x640xf32, #tpu.memory_space<vmem>>, vector<8x384xf32>
    %14 = tpu.concatenate %10, %11, %12, %13 in 0 : vector<8x384xf32>, vector<8x384xf32>, vector<8x384xf32>, vector<8x384xf32> -> vector<32x384xf32>
    %c0_18 = arith.constant 0 : index
    %c0_19 = arith.constant 0 : index
    %15 = vector.load %arg2[%c0_18, %c0_19] : memref<8x32xf32, #tpu.memory_space<vmem>>, vector<8x32xf32>
    %cst_20 = arith.constant dense<0.000000e+00> : vector<8x384xf32>
    %16 = tpu.matmul %15, %14, %cst_20 {dimension_numbers = #tpu.dot_dimension_numbers<[1], [0], [0], [1], [0, 0, 1, 1], [], []>} : vector<8x32xf32>, vector<32x384xf32>, vector<8x384xf32> -> vector<8x384xf32>
    %c0_21 = arith.constant 0 : index
    %c0_22 = arith.constant 0 : index
    %17 = vector.load %arg3[%c0_21, %c0_22] : memref<8x1xf32, #tpu.memory_space<vmem>>, vector<8x1xf32>
    %18 = vector.broadcast %17 : vector<8x1xf32> to vector<8x384xf32>
    %19 = arith.addf %16, %18 : vector<8x384xf32>
    %cst_23 = arith.constant 0.00999999977 : f32
    %20 = vector.broadcast %cst_23 : f32 to vector<8x384xf32>
    %21 = arith.mulf %20, %19 : vector<8x384xf32>
    %22 = arith.maximumf %19, %21 : vector<8x384xf32>
    %c0_24 = arith.constant 0 : index
    %c0_25 = arith.constant 0 : index
    %23 = vector.load %arg6[%c0_24, %c0_25] : memref<1x384xf32, #tpu.memory_space<vmem>>, vector<1x384xf32>
    %24 = vector.broadcast %23 : vector<1x384xf32> to vector<8x384xf32>
    %25 = arith.mulf %22, %24 : vector<8x384xf32>
    %c0_26 = arith.constant 0 : index
    %c128_27 = arith.constant 128 : index
    %26 = vector.load %arg15[%c0_26, %c128_27] : memref<8x640xf32, #tpu.memory_space<vmem>>, vector<8x384xf32>
    tpu.vector_store %arg15[%c0_26, %c128_27], %25 {strides = array<i32>} : memref<8x640xf32, #tpu.memory_space<vmem>>, vector<8x384xf32>,
    %c0_28 = arith.constant 0 : index
    %c109 = arith.constant 109 : index
    %27 = vector.load %arg15[%c0_28, %c109] : memref<8x640xf32, #tpu.memory_space<vmem>>, vector<8x384xf32>
    %c0_29 = arith.constant 0 : index
    %c110 = arith.constant 110 : index
    %28 = vector.load %arg15[%c0_29, %c110] : memref<8x640xf32, #tpu.memory_space<vmem>>, vector<8x384xf32>
    %c0_30 = arith.constant 0 : index
    %c127 = arith.constant 127 : index
    %29 = vector.load %arg15[%c0_30, %c127] : memref<8x640xf32, #tpu.memory_space<vmem>>, vector<8x384xf32>
    %c0_31 = arith.constant 0 : index
    %c128_32 = arith.constant 128 : index
    %30 = vector.load %arg15[%c0_31, %c128_32] : memref<8x640xf32, #tpu.memory_space<vmem>>, vector<8x384xf32>
    %31 = tpu.concatenate %27, %28, %29, %30 in 0 : vector<8x384xf32>, vector<8x384xf32>, vector<8x384xf32>, vector<8x384xf32> -> vector<32x384xf32>
    %c0_33 = arith.constant 0 : index
    %c0_34 = arith.constant 0 : index
    %32 = vector.load %arg4[%c0_33, %c0_34] : memref<8x32xf32, #tpu.memory_space<vmem>>, vector<8x32xf32>
    %cst_35 = arith.constant dense<0.000000e+00> : vector<8x384xf32>
    %33 = tpu.matmul %32, %31, %cst_35 {dimension_numbers = #tpu.dot_dimension_numbers<[1], [0], [0], [1], [0, 0, 1, 1], [], []>} : vector<8x32xf32>, vector<32x384xf32>, vector<8x384xf32> -> vector<8x384xf32>
    %c0_36 = arith.constant 0 : index
    %c0_37 = arith.constant 0 : index
    %34 = vector.load %arg5[%c0_36, %c0_37] : memref<8x1xf32, #tpu.memory_space<vmem>>, vector<8x1xf32>
    %35 = vector.broadcast %34 : vector<8x1xf32> to vector<8x384xf32>
    %36 = arith.addf %33, %35 : vector<8x384xf32>
    %37 = vector.broadcast %6 : vector<1x384xf32> to vector<8x384xf32>
    %38 = arith.mulf %36, %37 : vector<8x384xf32>
    %39 = arith.addf %38, %8 : vector<8x384xf32>
    %c0_38 = arith.constant 0 : index
    %c0_39 = arith.constant 0 : index
    %c0_40 = arith.constant 0 : index
    %40 = vector.load %arg13[%c0_38, %c0_39, %c0_40] : memref<1x16x384xf32, #tpu.memory_space<vmem>>, vector<1x8x384xf32>
    %41 = vector.shape_cast %40 : vector<1x8x384xf32> to vector<8x384xf32>
    %42 = vector.shape_cast %39 : vector<8x384xf32> to vector<1x8x384xf32>
    tpu.vector_store %arg13[%c0_38, %c0_39, %c0_40], %42 {strides = array<i32>} : memref<1x16x384xf32, #tpu.memory_space<vmem>>, vector<1x8x384xf32>,
    %c0_41 = arith.constant 0 : index
    %c128_42 = arith.constant 128 : index
    %43 = vector.load %arg14[%c0_41, %c128_42] : memref<8x640xf32, #tpu.memory_space<vmem>>, vector<8x384xf32>
    tpu.vector_store %arg14[%c0_41, %c128_42], %39 {strides = array<i32>} : memref<8x640xf32, #tpu.memory_space<vmem>>, vector<8x384xf32>,
    %c0_43 = arith.constant 0 : index
    %c109_44 = arith.constant 109 : index
    %44 = vector.load %arg14[%c0_43, %c109_44] : memref<8x640xf32, #tpu.memory_space<vmem>>, vector<8x384xf32>
    %c0_45 = arith.constant 0 : index
    %c110_46 = arith.constant 110 : index
    %45 = vector.load %arg14[%c0_45, %c110_46] : memref<8x640xf32, #tpu.memory_space<vmem>>, vector<8x384xf32>
    %c0_47 = arith.constant 0 : index
    %c111 = arith.constant 111 : index
    %46 = vector.load %arg14[%c0_47, %c111] : memref<8x640xf32, #tpu.memory_space<vmem>>, vector<8x384xf32>
    %c0_48 = arith.constant 0 : index
    %c127_49 = arith.constant 127 : index
    %47 = vector.load %arg14[%c0_48, %c127_49] : memref<8x640xf32, #tpu.memory_space<vmem>>, vector<8x384xf32>
    %c0_50 = arith.constant 0 : index
    %c128_51 = arith.constant 128 : index
    %48 = vector.load %arg14[%c0_50, %c128_51] : memref<8x640xf32, #tpu.memory_space<vmem>>, vector<8x384xf32>
    %c0_52 = arith.constant 0 : index
    %c129_53 = arith.constant 129 : index
    %49 = vector.load %arg14[%c0_52, %c129_53] : memref<8x640xf32, #tpu.memory_space<vmem>>, vector<8x384xf32>
    %c0_54 = arith.constant 0 : index
    %c145 = arith.constant 145 : index
    %50 = vector.load %arg14[%c0_54, %c145] : memref<8x640xf32, #tpu.memory_space<vmem>>, vector<8x384xf32>
    %c0_55 = arith.constant 0 : index
    %c146_56 = arith.constant 146 : index
    %51 = vector.load %arg14[%c0_55, %c146_56] : memref<8x640xf32, #tpu.memory_space<vmem>>, vector<8x384xf32>
    %c0_57 = arith.constant 0 : index
    %c147_58 = arith.constant 147 : index
    %52 = vector.load %arg14[%c0_57, %c147_58] : memref<8x640xf32, #tpu.memory_space<vmem>>, vector<8x384xf32>
    %53 = tpu.concatenate %44, %45, %46, %47, %48, %49, %50, %51, %52 in 0 : vector<8x384xf32>, vector<8x384xf32>, vector<8x384xf32>, vector<8x384xf32>, vector<8x384xf32>, vector<8x384xf32>, vector<8x384xf32>, vector<8x384xf32>, vector<8x384xf32> -> vector<72x384xf32>
    %c0_59 = arith.constant 0 : index
    %c0_60 = arith.constant 0 : index
    %54 = vector.load %arg7[%c0_59, %c0_60] : memref<8x72xf32, #tpu.memory_space<vmem>>, vector<8x72xf32>
    %cst_61 = arith.constant dense<0.000000e+00> : vector<8x384xf32>
    %55 = tpu.matmul %54, %53, %cst_61 {dimension_numbers = #tpu.dot_dimension_numbers<[1], [0], [0], [1], [0, 0, 1, 1], [], []>} : vector<8x72xf32>, vector<72x384xf32>, vector<8x384xf32> -> vector<8x384xf32>
    %c0_62 = arith.constant 0 : index
    %c0_63 = arith.constant 0 : index
    %56 = vector.load %arg8[%c0_62, %c0_63] : memref<8x1xf32, #tpu.memory_space<vmem>>, vector<8x1xf32>
    %57 = vector.broadcast %56 : vector<8x1xf32> to vector<8x384xf32>
    %58 = arith.addf %55, %57 : vector<8x384xf32>
    %cst_64 = arith.constant 0.00999999977 : f32
    %59 = vector.broadcast %cst_64 : f32 to vector<8x384xf32>
    %60 = arith.mulf %59, %58 : vector<8x384xf32>
    %61 = arith.maximumf %58, %60 : vector<8x384xf32>
    %c0_65 = arith.constant 0 : index
    %c0_66 = arith.constant 0 : index
    %62 = vector.load %arg11[%c0_65, %c0_66] : memref<1x384xf32, #tpu.memory_space<vmem>>, vector<1x384xf32>
    %63 = vector.broadcast %62 : vector<1x384xf32> to vector<8x384xf32>
    %64 = arith.mulf %61, %63 : vector<8x384xf32>
    %c0_67 = arith.constant 0 : index
    %c128_68 = arith.constant 128 : index
    %65 = vector.load %arg15[%c0_67, %c128_68] : memref<8x640xf32, #tpu.memory_space<vmem>>, vector<8x384xf32>
    tpu.vector_store %arg15[%c0_67, %c128_68], %64 {strides = array<i32>} : memref<8x640xf32, #tpu.memory_space<vmem>>, vector<8x384xf32>,
    %c0_69 = arith.constant 0 : index
    %c109_70 = arith.constant 109 : index
    %66 = vector.load %arg15[%c0_69, %c109_70] : memref<8x640xf32, #tpu.memory_space<vmem>>, vector<8x384xf32>
    %c0_71 = arith.constant 0 : index
    %c110_72 = arith.constant 110 : index
    %67 = vector.load %arg15[%c0_71, %c110_72] : memref<8x640xf32, #tpu.memory_space<vmem>>, vector<8x384xf32>
    %c0_73 = arith.constant 0 : index
    %c111_74 = arith.constant 111 : index
    %68 = vector.load %arg15[%c0_73, %c111_74] : memref<8x640xf32, #tpu.memory_space<vmem>>, vector<8x384xf32>
    %c0_75 = arith.constant 0 : index
    %c127_76 = arith.constant 127 : index
    %69 = vector.load %arg15[%c0_75, %c127_76] : memref<8x640xf32, #tpu.memory_space<vmem>>, vector<8x384xf32>
    %c0_77 = arith.constant 0 : index
    %c128_78 = arith.constant 128 : index
    %70 = vector.load %arg15[%c0_77, %c128_78] : memref<8x640xf32, #tpu.memory_space<vmem>>, vector<8x384xf32>
    %c0_79 = arith.constant 0 : index
    %c129_80 = arith.constant 129 : index
    %71 = vector.load %arg15[%c0_79, %c129_80] : memref<8x640xf32, #tpu.memory_space<vmem>>, vector<8x384xf32>
    %c0_81 = arith.constant 0 : index
    %c145_82 = arith.constant 145 : index
    %72 = vector.load %arg15[%c0_81, %c145_82] : memref<8x640xf32, #tpu.memory_space<vmem>>, vector<8x384xf32>
    %c0_83 = arith.constant 0 : index
    %c146_84 = arith.constant 146 : index
    %73 = vector.load %arg15[%c0_83, %c146_84] : memref<8x640xf32, #tpu.memory_space<vmem>>, vector<8x384xf32>
    %c0_85 = arith.constant 0 : index
    %c147_86 = arith.constant 147 : index
    %74 = vector.load %arg15[%c0_85, %c147_86] : memref<8x640xf32, #tpu.memory_space<vmem>>, vector<8x384xf32>
    %75 = tpu.concatenate %66, %67, %68, %69, %70, %71, %72, %73, %74 in 0 : vector<8x384xf32>, vector<8x384xf32>, vector<8x384xf32>, vector<8x384xf32>, vector<8x384xf32>, vector<8x384xf32>, vector<8x384xf32>, vector<8x384xf32>, vector<8x384xf32> -> vector<72x384xf32>
    %c0_87 = arith.constant 0 : index
    %c0_88 = arith.constant 0 : index
    %76 = vector.load %arg9[%c0_87, %c0_88] : memref<8x72xf32, #tpu.memory_space<vmem>>, vector<8x72xf32>
    %cst_89 = arith.constant dense<0.000000e+00> : vector<8x384xf32>
    %77 = tpu.matmul %76, %75, %cst_89 {dimension_numbers = #tpu.dot_dimension_numbers<[1], [0], [0], [1], [0, 0, 1, 1], [], []>} : vector<8x72xf32>, vector<72x384xf32>, vector<8x384xf32> -> vector<8x384xf32>
    %c0_90 = arith.constant 0 : index
    %c0_91 = arith.constant 0 : index
    %78 = vector.load %arg10[%c0_90, %c0_91] : memref<8x1xf32, #tpu.memory_space<vmem>>, vector<8x1xf32>
    %79 = vector.broadcast %78 : vector<8x1xf32> to vector<8x384xf32>
    %80 = arith.addf %77, %79 : vector<8x384xf32>
    %81 = vector.broadcast %6 : vector<1x384xf32> to vector<8x384xf32>
    %82 = arith.mulf %80, %81 : vector<8x384xf32>
    %83 = arith.addf %82, %39 : vector<8x384xf32>
    %c0_92 = arith.constant 0 : index
    %c8 = arith.constant 8 : index
    %c0_93 = arith.constant 0 : index
    %84 = vector.load %arg13[%c0_92, %c8, %c0_93] : memref<1x16x384xf32, #tpu.memory_space<vmem>>, vector<1x8x384xf32>
    %85 = vector.shape_cast %84 : vector<1x8x384xf32> to vector<8x384xf32>
    %86 = vector.shape_cast %83 : vector<8x384xf32> to vector<1x8x384xf32>
    tpu.vector_store %arg13[%c0_92, %c8, %c0_93], %86 {strides = array<i32>} : memref<1x16x384xf32, #tpu.memory_space<vmem>>, vector<1x8x384xf32>,
    return
  }
  func.func @transform_0(%arg0: i32) -> (i32, i32, i32) {
    %c0_i32 = arith.constant 0 : i32
    %c0_i32_0 = arith.constant 0 : i32
    %c0_i32_1 = arith.constant 0 : i32
    return %arg0, %c0_i32, %c0_i32_0 : i32, i32, i32
  }
  func.func @transform_1(%arg0: i32) -> (i32, i32) {
    %c0_i32 = arith.constant 0 : i32
    %c0_i32_0 = arith.constant 0 : i32
    %c0_i32_1 = arith.constant 0 : i32
    return %c0_i32, %c0_i32_0 : i32, i32
  }
  func.func @transform_2(%arg0: i32) -> (i32, i32) {
    %c0_i32 = arith.constant 0 : i32
    %c0_i32_0 = arith.constant 0 : i32
    %c0_i32_1 = arith.constant 0 : i32
    return %c0_i32, %c0_i32_0 : i32, i32
  }
  func.func @transform_3(%arg0: i32) -> (i32, i32) {
    %c0_i32 = arith.constant 0 : i32
    %c0_i32_0 = arith.constant 0 : i32
    %c0_i32_1 = arith.constant 0 : i32
    return %c0_i32, %c0_i32_0 : i32, i32
  }
  func.func @transform_4(%arg0: i32) -> (i32, i32) {
    %c0_i32 = arith.constant 0 : i32
    %c0_i32_0 = arith.constant 0 : i32
    %c0_i32_1 = arith.constant 0 : i32
    return %c0_i32, %c0_i32_0 : i32, i32
  }
  func.func @transform_5(%arg0: i32) -> (i32, i32) {
    %c0_i32 = arith.constant 0 : i32
    %c0_i32_0 = arith.constant 0 : i32
    %c0_i32_1 = arith.constant 0 : i32
    return %c0_i32, %c0_i32_0 : i32, i32
  }
  func.func @transform_6(%arg0: i32) -> (i32, i32) {
    %c0_i32 = arith.constant 0 : i32
    %c0_i32_0 = arith.constant 0 : i32
    %c0_i32_1 = arith.constant 0 : i32
    return %c0_i32, %c0_i32_0 : i32, i32
  }
  func.func @transform_7(%arg0: i32) -> (i32, i32) {
    %c0_i32 = arith.constant 0 : i32
    %c0_i32_0 = arith.constant 0 : i32
    %c0_i32_1 = arith.constant 0 : i32
    return %c0_i32, %c0_i32_0 : i32, i32
  }
  func.func @transform_8(%arg0: i32) -> (i32, i32) {
    %c0_i32 = arith.constant 0 : i32
    %c0_i32_0 = arith.constant 0 : i32
    %c0_i32_1 = arith.constant 0 : i32
    return %c0_i32, %c0_i32_0 : i32, i32
  }
  func.func @transform_9(%arg0: i32) -> (i32, i32) {
    %c0_i32 = arith.constant 0 : i32
    %c0_i32_0 = arith.constant 0 : i32
    %c0_i32_1 = arith.constant 0 : i32
    return %c0_i32, %c0_i32_0 : i32, i32
  }
  func.func @transform_10(%arg0: i32) -> (i32, i32) {
    %c0_i32 = arith.constant 0 : i32
    %c0_i32_0 = arith.constant 0 : i32
    %c0_i32_1 = arith.constant 0 : i32
    return %c0_i32, %c0_i32_0 : i32, i32
  }
  func.func @transform_11(%arg0: i32) -> (i32, i32) {
    %c0_i32 = arith.constant 0 : i32
    %c0_i32_0 = arith.constant 0 : i32
    %c0_i32_1 = arith.constant 0 : i32
    return %c0_i32, %c0_i32_0 : i32, i32
  }
  func.func @transform_12(%arg0: i32) -> (i32, i32, i32) {
    %c0_i32 = arith.constant 0 : i32
    %c0_i32_0 = arith.constant 0 : i32
    %c0_i32_1 = arith.constant 0 : i32
    return %arg0, %c0_i32, %c0_i32_0 : i32, i32, i32
  }
}

</mosaic_0001>

<llo_original>
// kernel: channel_increase_block.1
$region0: #{channel_increase_block.1}
  #allocation0 [shape = 'u32[]', space=smem, size = 0x4, offset = 0x4, fixed_abs, tag = 'smem constant byte address 0x4 - core index']
  #allocation1 [shape = 'u32[144,128]{1,0:T(1,128)}', space=vmem, size = 0x12000, scoped, tag = 'internal scratch']
  #allocation2 [shape = 'f32[8,640]{1,0:T(8,128)}', space=vmem, size = 0x5000, scoped, tag = 'scratch operand']
  #allocation3 [shape = 'f32[8,640]{1,0:T(8,128)}', space=vmem, size = 0x5000, scoped, tag = 'scratch operand']
  %s0 = inlined_call_operand.vmem [shape: f32[2,8,384], index: 0, kind: input, shape index: {}]
  %s1 = inlined_call_operand.vmem [shape: f32[8,32], index: 1, kind: input, shape index: {}]
  %s2 = inlined_call_operand.vmem [shape: f32[8,1], index: 2, kind: input, shape index: {}]
  %s3 = inlined_call_operand.vmem [shape: f32[8,32], index: 3, kind: input, shape index: {}]
  %s4 = inlined_call_operand.vmem [shape: f32[8,1], index: 4, kind: input, shape index: {}]
  %s5 = inlined_call_operand.vmem [shape: f32[1,384], index: 5, kind: input, shape index: {}]
  %s6 = inlined_call_operand.vmem [shape: f32[8,72], index: 6, kind: input, shape index: {}]
  %s7 = inlined_call_operand.vmem [shape: f32[8,1], index: 7, kind: input, shape index: {}]
  %s8 = inlined_call_operand.vmem [shape: f32[8,72], index: 8, kind: input, shape index: {}]
  %s9 = inlined_call_operand.vmem [shape: f32[8,1], index: 9, kind: input, shape index: {}]
  %s10 = inlined_call_operand.vmem [shape: f32[1,384], index: 10, kind: input, shape index: {}, may-alias: {10,11}]
  %s11 = inlined_call_operand.vmem [shape: f32[1,384], index: 11, kind: input, shape index: {}, may-alias: {10,11}]
  %s12 = inlined_call_operand.vmem [shape: f32[2,16,384], index: 12, kind: output, shape index: {}]
  %s13 = sld [smem:[#allocation0]]
  $region81: #{channel_increase_block.1} parent=0
    _
  %s15 = ssub.s32 1, %s13
  %s16 = scalar_select 0, %s15, %s13
  loop: start=0, step=1, limit=4
  $region2: #{channel_increase_block.1} parent=0 // loop_pre_header
    _
  $region3: #{channel_increase_block.1} parent=0 // loop_header
    %s18 = sphi 0, %s22
    %p19 = scmp.ge.s32.totalorder %s18, 4
    %s28 = sphi 0, %s30
    %s31 = sphi 0, %s28
    %s32 = sphi 0, %s31
    %s48 = sphi 0, %s32
    %s52 = sphi 0, %s52
    %s54 = sphi 0, %s52
    %s55 = sphi 0, %s54
    %s69 = sphi 0, %s55
    %s73 = sphi 0, %s73
    %s75 = sphi 0, %s73
    %s76 = sphi 0, %s75
    %s90 = sphi 0, %s76
    %s94 = sphi 0, %s94
    %s96 = sphi 0, %s94
    %s97 = sphi 0, %s96
    %s111 = sphi 0, %s97
    %s115 = sphi 0, %s115
    %s117 = sphi 0, %s115
    %s118 = sphi 0, %s117
    %s132 = sphi 0, %s118
    %s136 = sphi 0, %s136
    %s138 = sphi 0, %s136
    %s139 = sphi 0, %s138
    %s153 = sphi 0, %s139
    %s157 = sphi 0, %s157
    %s159 = sphi 0, %s157
    %s160 = sphi 0, %s159
    %s174 = sphi 0, %s160
    %s178 = sphi 0, %s178
    %s180 = sphi 0, %s178
    %s181 = sphi 0, %s180
    %s195 = sphi 0, %s181
    %s199 = sphi 0, %s199
    %s201 = sphi 0, %s199
    %s202 = sphi 0, %s201
    %s216 = sphi 0, %s202
    %s220 = sphi 0, %s220
    %s222 = sphi 0, %s220
    %s223 = sphi 0, %s222
    %s237 = sphi 0, %s223
    %s241 = sphi 0, %s241
    %s243 = sphi 0, %s241
    %s244 = sphi 0, %s243
    %s258 = sphi 0, %s244
    %s262 = sphi 0, %s262
    %s264 = sphi 0, %s262
    %s265 = sphi 0, %s264
    %s279 = sphi 0, %s265
    %s285 = sphi 0, %s287
    %s288 = sphi 0, %s285
    %s289 = sphi 0, %s288
    %s305 = sphi 0, %s289
  $region4: #{channel_increase_block.1} parent=0 // loop_header_branch
    %21 = sbr.rel (%p19) target = $region8
  $region5: #{channel_increase_block.1} parent=0 // loop_body
    %s23 = ssub.s32 %s18, 1
    %s24 = ssub.s32 %s18, 2
    %s25 = sadd.s32 %s18, 1
    %s26 = ssub.s32 %s18, %s25
    %p27 = scmp.eq.s32.totalorder %s26, 0
    %s29 = sadd.s32 %s28, 1
    %s30 = scalar_select %p27, %s28, %s29
    %p33 = pneg %p27
    %p34 = scmp.eq.s32.totalorder %s18, 1
    %p35 = por %p33, %p34
    %p36 = scmp.ne.s32.totalorder %s28, %s31
    %p37 = scmp.eq.s32.totalorder %s18, 0
    %p38 = por %p36, %p37
    %p39 = scmp.ne.s32.totalorder %s28, %s31
    %p40 = scmp.eq.s32.totalorder %s23, 1
    %p41 = por %p39, %p40
    %p42 = scmp.ne.s32.totalorder %s31, %s32
    %p43 = scmp.eq.s32.totalorder %s23, 0
    %p44 = por %p42, %p43
    %p45 = scmp.ne.s32.totalorder %s31, %s32
    %p46 = scmp.eq.s32.totalorder %s24, 1
    %p47 = por %p45, %p46
    %p49 = scmp.ne.s32.totalorder %s32, %s48
    %p50 = scmp.eq.s32.totalorder %s24, 0
    %p51 = por %p49, %p50
    %s53 = sadd.s32 %s52, 1
    %p56 = scmp.eq.s32.totalorder %s18, 1
    %p57 = scmp.ne.s32.totalorder %s52, %s54
    %p58 = scmp.eq.s32.totalorder %s18, 0
    %p59 = por %p57, %p58
    %p60 = scmp.ne.s32.totalorder %s52, %s54
    %p61 = scmp.eq.s32.totalorder %s23, 1
    %p62 = por %p60, %p61
    %p63 = scmp.ne.s32.totalorder %s54, %s55
    %p64 = scmp.eq.s32.totalorder %s23, 0
    %p65 = por %p63, %p64
    %p66 = scmp.ne.s32.totalorder %s54, %s55
    %p67 = scmp.eq.s32.totalorder %s24, 1
    %p68 = por %p66, %p67
    %p70 = scmp.ne.s32.totalorder %s55, %s69
    %p71 = scmp.eq.s32.totalorder %s24, 0
    %p72 = por %p70, %p71
    %s74 = sadd.s32 %s73, 1
    %p77 = scmp.eq.s32.totalorder %s18, 1
    %p78 = scmp.ne.s32.totalorder %s73, %s75
    %p79 = scmp.eq.s32.totalorder %s18, 0
    %p80 = por %p78, %p79
    %p81 = scmp.ne.s32.totalorder %s73, %s75
    %p82 = scmp.eq.s32.totalorder %s23, 1
    %p83 = por %p81, %p82
    %p84 = scmp.ne.s32.totalorder %s75, %s76
    %p85 = scmp.eq.s32.totalorder %s23, 0
    %p86 = por %p84, %p85
    %p87 = scmp.ne.s32.totalorder %s75, %s76
    %p88 = scmp.eq.s32.totalorder %s24, 1
    %p89 = por %p87, %p88
    %p91 = scmp.ne.s32.totalorder %s76, %s90
    %p92 = scmp.eq.s32.totalorder %s24, 0
    %p93 = por %p91, %p92
    %s95 = sadd.s32 %s94, 1
    %p98 = scmp.eq.s32.totalorder %s18, 1
    %p99 = scmp.ne.s32.totalorder %s94, %s96
    %p100 = scmp.eq.s32.totalorder %s18, 0
    %p101 = por %p99, %p100
    %p102 = scmp.ne.s32.totalorder %s94, %s96
    %p103 = scmp.eq.s32.totalorder %s23, 1
    %p104 = por %p102, %p103
    %p105 = scmp.ne.s32.totalorder %s96, %s97
    %p106 = scmp.eq.s32.totalorder %s23, 0
    %p107 = por %p105, %p106
    %p108 = scmp.ne.s32.totalorder %s96, %s97
    %p109 = scmp.eq.s32.totalorder %s24, 1
    %p110 = por %p108, %p109
    %p112 = scmp.ne.s32.totalorder %s97, %s111
    %p113 = scmp.eq.s32.totalorder %s24, 0
    %p114 = por %p112, %p113
    %s116 = sadd.s32 %s115, 1
    %p119 = scmp.eq.s32.totalorder %s18, 1
    %p120 = scmp.ne.s32.totalorder %s115, %s117
    %p121 = scmp.eq.s32.totalorder %s18, 0
    %p122 = por %p120, %p121
    %p123 = scmp.ne.s32.totalorder %s115, %s117
    %p124 = scmp.eq.s32.totalorder %s23, 1
    %p125 = por %p123, %p124
    %p126 = scmp.ne.s32.totalorder %s117, %s118
    %p127 = scmp.eq.s32.totalorder %s23, 0
    %p128 = por %p126, %p127
    %p129 = scmp.ne.s32.totalorder %s117, %s118
    %p130 = scmp.eq.s32.totalorder %s24, 1
    %p131 = por %p129, %p130
    %p133 = scmp.ne.s32.totalorder %s118, %s132
    %p134 = scmp.eq.s32.totalorder %s24, 0
    %p135 = por %p133, %p134
    %s137 = sadd.s32 %s136, 1
    %p140 = scmp.eq.s32.totalorder %s18, 1
    %p141 = scmp.ne.s32.totalorder %s136, %s138
    %p142 = scmp.eq.s32.totalorder %s18, 0
    %p143 = por %p141, %p142
    %p144 = scmp.ne.s32.totalorder %s136, %s138
    %p145 = scmp.eq.s32.totalorder %s23, 1
    %p146 = por %p144, %p145
    %p147 = scmp.ne.s32.totalorder %s138, %s139
    %p148 = scmp.eq.s32.totalorder %s23, 0
    %p149 = por %p147, %p148
    %p150 = scmp.ne.s32.totalorder %s138, %s139
    %p151 = scmp.eq.s32.totalorder %s24, 1
    %p152 = por %p150, %p151
    %p154 = scmp.ne.s32.totalorder %s139, %s153
    %p155 = scmp.eq.s32.totalorder %s24, 0
    %p156 = por %p154, %p155
    %s158 = sadd.s32 %s157, 1
    %p161 = scmp.eq.s32.totalorder %s18, 1
    %p162 = scmp.ne.s32.totalorder %s157, %s159
    %p163 = scmp.eq.s32.totalorder %s18, 0
    %p164 = por %p162, %p163
    %p165 = scmp.ne.s32.totalorder %s157, %s159
    %p166 = scmp.eq.s32.totalorder %s23, 1
    %p167 = por %p165, %p166
    %p168 = scmp.ne.s32.totalorder %s159, %s160
    %p169 = scmp.eq.s32.totalorder %s23, 0
    %p170 = por %p168, %p169
    %p171 = scmp.ne.s32.totalorder %s159, %s160
    %p172 = scmp.eq.s32.totalorder %s24, 1
    %p173 = por %p171, %p172
    %p175 = scmp.ne.s32.totalorder %s160, %s174
    %p176 = scmp.eq.s32.totalorder %s24, 0
    %p177 = por %p175, %p176
    %s179 = sadd.s32 %s178, 1
    %p182 = scmp.eq.s32.totalorder %s18, 1
    %p183 = scmp.ne.s32.totalorder %s178, %s180
    %p184 = scmp.eq.s32.totalorder %s18, 0
    %p185 = por %p183, %p184
    %p186 = scmp.ne.s32.totalorder %s178, %s180
    %p187 = scmp.eq.s32.totalorder %s23, 1
    %p188 = por %p186, %p187
    %p189 = scmp.ne.s32.totalorder %s180, %s181
    %p190 = scmp.eq.s32.totalorder %s23, 0
    %p191 = por %p189, %p190
    %p192 = scmp.ne.s32.totalorder %s180, %s181
    %p193 = scmp.eq.s32.totalorder %s24, 1
    %p194 = por %p192, %p193
    %p196 = scmp.ne.s32.totalorder %s181, %s195
    %p197 = scmp.eq.s32.totalorder %s24, 0
    %p198 = por %p196, %p197
    %s200 = sadd.s32 %s199, 1
    %p203 = scmp.eq.s32.totalorder %s18, 1
    %p204 = scmp.ne.s32.totalorder %s199, %s201
    %p205 = scmp.eq.s32.totalorder %s18, 0
    %p206 = por %p204, %p205
    %p207 = scmp.ne.s32.totalorder %s199, %s201
    %p208 = scmp.eq.s32.totalorder %s23, 1
    %p209 = por %p207, %p208
    %p210 = scmp.ne.s32.totalorder %s201, %s202
    %p211 = scmp.eq.s32.totalorder %s23, 0
    %p212 = por %p210, %p211
    %p213 = scmp.ne.s32.totalorder %s201, %s202
    %p214 = scmp.eq.s32.totalorder %s24, 1
    %p215 = por %p213, %p214
    %p217 = scmp.ne.s32.totalorder %s202, %s216
    %p218 = scmp.eq.s32.totalorder %s24, 0
    %p219 = por %p217, %p218
    %s221 = sadd.s32 %s220, 1
    %p224 = scmp.eq.s32.totalorder %s18, 1
    %p225 = scmp.ne.s32.totalorder %s220, %s222
    %p226 = scmp.eq.s32.totalorder %s18, 0
    %p227 = por %p225, %p226
    %p228 = scmp.ne.s32.totalorder %s220, %s222
    %p229 = scmp.eq.s32.totalorder %s23, 1
    %p230 = por %p228, %p229
    %p231 = scmp.ne.s32.totalorder %s222, %s223
    %p232 = scmp.eq.s32.totalorder %s23, 0
    %p233 = por %p231, %p232
    %p234 = scmp.ne.s32.totalorder %s222, %s223
    %p235 = scmp.eq.s32.totalorder %s24, 1
    %p236 = por %p234, %p235
    %p238 = scmp.ne.s32.totalorder %s223, %s237
    %p239 = scmp.eq.s32.totalorder %s24, 0
    %p240 = por %p238, %p239
    %s242 = sadd.s32 %s241, 1
    %p245 = scmp.eq.s32.totalorder %s18, 1
    %p246 = scmp.ne.s32.totalorder %s241, %s243
    %p247 = scmp.eq.s32.totalorder %s18, 0
    %p248 = por %p246, %p247
    %p249 = scmp.ne.s32.totalorder %s241, %s243
    %p250 = scmp.eq.s32.totalorder %s23, 1
    %p251 = por %p249, %p250
    %p252 = scmp.ne.s32.totalorder %s243, %s244
    %p253 = scmp.eq.s32.totalorder %s23, 0
    %p254 = por %p252, %p253
    %p255 = scmp.ne.s32.totalorder %s243, %s244
    %p256 = scmp.eq.s32.totalorder %s24, 1
    %p257 = por %p255, %p256
    %p259 = scmp.ne.s32.totalorder %s244, %s258
    %p260 = scmp.eq.s32.totalorder %s24, 0
    %p261 = por %p259, %p260
    %s263 = sadd.s32 %s262, 1
    %p266 = scmp.eq.s32.totalorder %s18, 1
    %p267 = scmp.ne.s32.totalorder %s262, %s264
    %p268 = scmp.eq.s32.totalorder %s18, 0
    %p269 = por %p267, %p268
    %p270 = scmp.ne.s32.totalorder %s262, %s264
    %p271 = scmp.eq.s32.totalorder %s23, 1
    %p272 = por %p270, %p271
    %p273 = scmp.ne.s32.totalorder %s264, %s265
    %p274 = scmp.eq.s32.totalorder %s23, 0
    %p275 = por %p273, %p274
    %p276 = scmp.ne.s32.totalorder %s264, %s265
    %p277 = scmp.eq.s32.totalorder %s24, 1
    %p278 = por %p276, %p277
    %p280 = scmp.ne.s32.totalorder %s265, %s279
    %p281 = scmp.eq.s32.totalorder %s24, 0
    %p282 = por %p280, %p281
    %s283 = ssub.s32 %s18, %s25
    %p284 = scmp.eq.s32.totalorder %s283, 0
    %s286 = sadd.s32 %s285, 1
    %s287 = scalar_select %p284, %s285, %s286
    %p290 = pneg %p284
    %p291 = scmp.eq.s32.totalorder %s18, 1
    %p292 = por %p290, %p291
    %p293 = scmp.ne.s32.totalorder %s285, %s288
    %p294 = scmp.eq.s32.totalorder %s18, 0
    %p295 = por %p293, %p294
    %p296 = scmp.ne.s32.totalorder %s285, %s288
    %p297 = scmp.eq.s32.totalorder %s23, 1
    %p298 = por %p296, %p297
    %p299 = scmp.ne.s32.totalorder %s288, %s289
    %p300 = scmp.eq.s32.totalorder %s23, 0
    %p301 = por %p299, %p300
    %p302 = scmp.ne.s32.totalorder %s288, %s289
    %p303 = scmp.eq.s32.totalorder %s24, 1
    %p304 = por %p302, %p303
    %p306 = scmp.ne.s32.totalorder %s289, %s305
    %p307 = scmp.eq.s32.totalorder %s24, 0
    %p308 = por %p306, %p307
    %p309 = scmp.le.s32.totalorder 1, %s18
    %p310 = scmp.lt.s32.totalorder %s18, 3
    %p311 = pnand %p309, %p310
    %p312 = pneg %p311
    // Predicated region
    $region9: #{channel_increase_block.1} parent=5 // pred_check
      _
    $region10: #{channel_increase_block.1} parent=5 // pred_check_branch
      %314 = sbr.rel (%p311) target = $region12
    $region11: #{channel_increase_block.1} parent=5 // pred_region
      %s315 = ssub.s32 %s18, 1
      // Predicated region
      $region13: #{channel_increase_block.1} parent=11 // pred_check
        %p316 = pneg %p65
      $region14: #{channel_increase_block.1} parent=11 // pred_check_branch
        %318 = sbr.rel (%p316) target = $region16
      $region15: #{channel_increase_block.1} parent=11 // pred_region
        _
      $region16: #{channel_increase_block.1} parent=11 // pred_fallthru
        _
      // Predicated region
      $region17: #{channel_increase_block.1} parent=11 // pred_check
        %p319 = pneg %p86
      $region18: #{channel_increase_block.1} parent=11 // pred_check_branch
        %321 = sbr.rel (%p319) target = $region20
      $region19: #{channel_increase_block.1} parent=11 // pred_region
        _
      $region20: #{channel_increase_block.1} parent=11 // pred_fallthru
        _
      // Predicated region
      $region21: #{channel_increase_block.1} parent=11 // pred_check
        %p322 = pneg %p107
      $region22: #{channel_increase_block.1} parent=11 // pred_check_branch
        %324 = sbr.rel (%p322) target = $region24
      $region23: #{channel_increase_block.1} parent=11 // pred_region
        _
      $region24: #{channel_increase_block.1} parent=11 // pred_fallthru
        _
      // Predicated region
      $region25: #{channel_increase_block.1} parent=11 // pred_check
        %p325 = pneg %p128
      $region26: #{channel_increase_block.1} parent=11 // pred_check_branch
        %327 = sbr.rel (%p325) target = $region28
      $region27: #{channel_increase_block.1} parent=11 // pred_region
        _
      $region28: #{channel_increase_block.1} parent=11 // pred_fallthru
        _
      // Predicated region
      $region29: #{channel_increase_block.1} parent=11 // pred_check
        %p328 = pneg %p149
      $region30: #{channel_increase_block.1} parent=11 // pred_check_branch
        %330 = sbr.rel (%p328) target = $region32
      $region31: #{channel_increase_block.1} parent=11 // pred_region
        _
      $region32: #{channel_increase_block.1} parent=11 // pred_fallthru
        _
      // Predicated region
      $region33: #{channel_increase_block.1} parent=11 // pred_check
        %p331 = pneg %p170
      $region34: #{channel_increase_block.1} parent=11 // pred_check_branch
        %333 = sbr.rel (%p331) target = $region36
      $region35: #{channel_increase_block.1} parent=11 // pred_region
        _
      $region36: #{channel_increase_block.1} parent=11 // pred_fallthru
        _
      // Predicated region
      $region37: #{channel_increase_block.1} parent=11 // pred_check
        %p334 = pneg %p191
      $region38: #{channel_increase_block.1} parent=11 // pred_check_branch
        %336 = sbr.rel (%p334) target = $region40
      $region39: #{channel_increase_block.1} parent=11 // pred_region
        _
      $region40: #{channel_increase_block.1} parent=11 // pred_fallthru
        _
      // Predicated region
      $region41: #{channel_increase_block.1} parent=11 // pred_check
        %p337 = pneg %p212
      $region42: #{channel_increase_block.1} parent=11 // pred_check_branch
        %339 = sbr.rel (%p337) target = $region44
      $region43: #{channel_increase_block.1} parent=11 // pred_region
        _
      $region44: #{channel_increase_block.1} parent=11 // pred_fallthru
        _
      // Predicated region
      $region45: #{channel_increase_block.1} parent=11 // pred_check
        %p340 = pneg %p233
      $region46: #{channel_increase_block.1} parent=11 // pred_check_branch
        %342 = sbr.rel (%p340) target = $region48
      $region47: #{channel_increase_block.1} parent=11 // pred_region
        _
      $region48: #{channel_increase_block.1} parent=11 // pred_fallthru
        _
      // Predicated region
      $region49: #{channel_increase_block.1} parent=11 // pred_check
        %p343 = pneg %p254
      $region50: #{channel_increase_block.1} parent=11 // pred_check_branch
        %345 = sbr.rel (%p343) target = $region52
      $region51: #{channel_increase_block.1} parent=11 // pred_region
        _
      $region52: #{channel_increase_block.1} parent=11 // pred_fallthru
        _
      // Predicated region
      $region53: #{channel_increase_block.1} parent=11 // pred_check
        %p346 = pneg %p275
      $region54: #{channel_increase_block.1} parent=11 // pred_check_branch
        %348 = sbr.rel (%p346) target = $region56
      $region55: #{channel_increase_block.1} parent=11 // pred_region
        _
      $region56: #{channel_increase_block.1} parent=11 // pred_fallthru
        _
    $region12: #{channel_increase_block.1} parent=5 // pred_fallthru
      _
    %p349 = scmp.lt.s32.totalorder %s18, 2
    // Predicated region
    $region57: #{channel_increase_block.1} parent=5 // pred_check
      %p350 = pneg %p349
    $region58: #{channel_increase_block.1} parent=5 // pred_check_branch
      %352 = sbr.rel (%p350) target = $region60
    $region59: #{channel_increase_block.1} parent=5 // pred_region
      // Predicated region
      $region61: #{channel_increase_block.1} parent=59 // pred_check
        %p353 = pneg %p38
      $region62: #{channel_increase_block.1} parent=59 // pred_check_branch
        %355 = sbr.rel (%p353) target = $region64
      $region63: #{channel_increase_block.1} parent=59 // pred_region
        %p356 = scmp.lt.s32.totalorder %s18, 1
        %s357 = scalar_select %p356, %s18, 1
        %s358 = smul.addr %s357, 3
        %s359 = smul.addr %s358, 8
        %s360 = scalar_lea.vmem %s0, %s359
      $region64: #{channel_increase_block.1} parent=59 // pred_fallthru
        _
    $region60: #{channel_increase_block.1} parent=5 // pred_fallthru
      _
    %p361 = scmp.le.s32.totalorder 1, %s18
    %p362 = scmp.lt.s32.totalorder %s18, 3
    %p363 = pnand %p361, %p362
    %p364 = pneg %p363
    // Predicated region
    $region65: #{channel_increase_block.1} parent=5 // pred_check
      _
    $region66: #{channel_increase_block.1} parent=5 // pred_check_branch
      %366 = sbr.rel (%p363) target = $region68
    $region67: #{channel_increase_block.1} parent=5 // pred_region
      %s367 = ssub.s32 %s18, 1
      %p368 = scmp.lt.s32.totalorder %s23, 1
      %s369 = scalar_select %p368, %s23, 1
      %s370 = smul.addr %s369, 3
      %s371 = smul.addr %s370, 8
      %s372 = scalar_lea.vmem %s0, %s371
      %p373 = pneg %p44
      %p374 = pneg %p41
      %p375 = pneg %p65
      %p376 = pneg %p62
      %p377 = pneg %p86
      %p378 = pneg %p83
      %p379 = pneg %p107
      %p380 = pneg %p104
      %p381 = pneg %p128
      %p382 = pneg %p125
      %p383 = pneg %p149
      %p384 = pneg %p146
      %p385 = pneg %p170
      %p386 = pneg %p167
      %p387 = pneg %p191
      %p388 = pneg %p188
      %p389 = pneg %p212
      %p390 = pneg %p209
      %p391 = pneg %p233
      %p392 = pneg %p230
      %p393 = pneg %p254
      %p394 = pneg %p251
      %p395 = pneg %p275
      %p396 = pneg %p272
      %p397 = pneg %p301
      %p398 = pneg %p298
      %p399 = scmp.lt.s32.totalorder %s23, 1
      %s400 = scalar_select %p399, %s23, 1
      %s401 = smul.addr %s400, 6
      %s402 = smul.addr %s401, 8
      %s403 = scalar_lea.vmem %s12, %s402
      %p404 = scmp.lt.s32.totalorder %s23, 1
      %s405 = scalar_select %p404, %s23, 1
      %s406 = smul.addr %s405, 3
      %s407 = smul.addr %s406, 8
      %s408 = scalar_lea.vmem %s0, %s407
      %p409 = scmp.lt.s32.totalorder %s23, 1
      %s410 = scalar_select %p409, %s23, 1
      %s411 = smul.addr %s410, 6
      %s412 = smul.addr %s411, 8
      %s413 = scalar_lea.vmem %s12, %s412
      %414 = vst [vmem:[#allocation2] sm:$0xff] 0.0
      %415 = vst [vmem:[#allocation3] sm:$0xff] 0.0
      %416 = vst [vmem:[#allocation2 + $0x20] sm:$0xff] 0.0
      %417 = vst [vmem:[#allocation3 + $0x20] sm:$0xff] 0.0
      %v418 = vld [vmem:[%s11] sm:$0x7]
      %v419 = vld [vmem:[%s408] sm:$0xff]
      %v420 = vld [vmem:[%s408 + $0x8] sm:$0xff]
      %v421 = vld [vmem:[%s408 + $0x10] sm:$0xff]
      %422 = vst [vmem:[#allocation2 + $0x8] sm:$0xff] %v419
      %423 = vst [vmem:[#allocation2 + $0x10] sm:$0xff] %v420
      %424 = vst [vmem:[#allocation2 + $0x18] sm:$0xff] %v421
      %v425 = vld [vmem:[#allocation2 + $0x8] sm:$0xff]
      %v426 = vld [vmem:[#allocation2 + $0x10] sm:$0xff]
      %v427 = vld [vmem:[#allocation2 + $0x18] sm:$0xff]
      %v428 = vld [vmem:[#allocation2 + $0x8] sm:$0xff]
      %v429 = vld [vmem:[#allocation2 + $0x10] sm:$0xff]
      %v430 = vld [vmem:[#allocation2 + $0x18] sm:$0xff]
      %v431 = vld [vmem:[#allocation2 + $0x20] sm:$0xff]
      %436 = vrot.lane.b32.xlu0 %v428, 127
      %v437 = vpop.permute.xlu0 %436
      %438 = vrot.lane.b32.xlu0 %v429, 127
      %v439 = vpop.permute.xlu0 %438
      %440 = vrot.lane.b32.xlu0 %v430, 127
      %v441 = vpop.permute.xlu0 %440
      %442 = vrot.lane.b32.xlu0 %v431, 127
      %v443 = vpop.permute.xlu0 %442
      %vm444 = vcmask 1039360
      %v445 = vsel %vm444, %v437, %v439
      %v446 = vsel %vm444, %v439, %v441
      %v447 = vsel %vm444, %v441, %v443
      %451 = vrot.lane.b32.xlu0 %v428, 110
      %v452 = vpop.permute.xlu0 %451
      %453 = vrot.lane.b32.xlu0 %v429, 110
      %v454 = vpop.permute.xlu0 %453
      %455 = vrot.lane.b32.xlu0 %v430, 110
      %v456 = vpop.permute.xlu0 %455
      %457 = vrot.lane.b32.xlu0 %v431, 110
      %v458 = vpop.permute.xlu0 %457
      %vm459 = vcmask 900096
      %v460 = vsel %vm459, %v452, %v454
      %v461 = vsel %vm459, %v454, %v456
      %v462 = vsel %vm459, %v456, %v458
      %466 = vrot.lane.b32.xlu0 %v428, 109
      %v467 = vpop.permute.xlu0 %466
      %468 = vrot.lane.b32.xlu0 %v429, 109
      %v469 = vpop.permute.xlu0 %468
      %470 = vrot.lane.b32.xlu0 %v430, 109
      %v471 = vpop.permute.xlu0 %470
      %472 = vrot.lane.b32.xlu0 %v431, 109
      %v473 = vpop.permute.xlu0 %472
      %vm474 = vcmask 891904
      %v475 = vsel %vm474, %v467, %v469
      %v476 = vsel %vm474, %v469, %v471
      %v477 = vsel %vm474, %v471, %v473
      %v481 = vld [vmem:[%s1] sm:$0xff]
      %v482 = vld [vmem:[%s2] sm:$0xff]
      %484 = vset.pattern.permute.xlu0 0
      %485 = vperm.xlu0 %484, %v482
      %v486 = vpop.permute.xlu0 %485
      %vm488 = vcmask 261120
      %v490 = vsel %vm488, %v481, 0
      %492 = vmatprep.subr.mxu0 0.0
      %493 = vmatpush1.msra.mxu0 0.0
      %494 = vmatprep.subr.mxu0 0.0
      %495 = vmatpush1.msra.mxu0 0.0
      %496 = vmatprep.subr.mxu0 0.0
      %497 = vmatpush1.msra.mxu0 0.0
      %498 = vmatprep.subr.mxu0 0.0
      %499 = vmatpush1.msra.mxu0 0.0
      %500 = vmatprep.subr.mxu0 0.0
      %501 = vmatpush1.msra.mxu0 0.0
      %502 = vmatprep.subr.mxu0 0.0
      %503 = vmatpush1.msra.mxu0 0.0
      %504 = vmatprep.subr.mxu0 0.0
      %505 = vmatpush1.msra.mxu0 0.0
      %506 = vmatprep.subr.mxu0 0.0
      %507 = vmatpush1.msra.mxu0 0.0
      %508 = vmatprep.subr.mxu0 0.0
      %509 = vmatpush1.msra.mxu0 0.0
      %510 = vmatprep.subr.mxu0 0.0
      %511 = vmatpush1.msra.mxu0 0.0
      %512 = vmatprep.subr.mxu0 0.0
      %513 = vmatpush1.msra.mxu0 0.0
      %514 = vmatprep.subr.mxu0 0.0
      %515 = vmatpush1.msra.mxu0 0.0
      %516 = vmatprep.subr.mxu0 %v476
      %517 = vmatpush1.msra.mxu0 %v475
      %518 = vmatprep.subr.mxu0 %v461
      %519 = vmatpush1.msra.mxu0 %v460
      %520 = vmatprep.subr.mxu0 %v446
      %521 = vmatpush1.msra.mxu0 %v445
      %522 = vmatprep.subr.mxu0 %v426
      %523 = vmatpush1.msra.mxu0 %v425
      %524 = vmatprep.subr.mxu0 0.0
      %525 = vmatpush2.msra.mxu0 0.0
      %526 = vmatprep.subr.mxu0 0.0
      %527 = vmatpush2.msra.mxu0 0.0
      %528 = vmatprep.subr.mxu0 0.0
      %529 = vmatpush2.msra.mxu0 0.0
      %530 = vmatprep.subr.mxu0 0.0
      %531 = vmatpush2.msra.mxu0 0.0
      %532 = vmatprep.subr.mxu0 0.0
      %533 = vmatpush2.msra.mxu0 0.0
      %534 = vmatprep.subr.mxu0 0.0
      %535 = vmatpush2.msra.mxu0 0.0
      %536 = vmatprep.subr.mxu0 0.0
      %537 = vmatpush2.msra.mxu0 0.0
      %538 = vmatprep.subr.mxu0 0.0
      %539 = vmatpush2.msra.mxu0 0.0
      %540 = vmatprep.subr.mxu0 0.0
      %541 = vmatpush2.msra.mxu0 0.0
      %542 = vmatprep.subr.mxu0 0.0
      %543 = vmatpush2.msra.mxu0 0.0
      %544 = vmatprep.subr.mxu0 0.0
      %545 = vmatpush2.msra.mxu0 0.0
      %546 = vmatprep.subr.mxu0 0.0
      %547 = vmatpush2.msra.mxu0 0.0
      %548 = vmatprep.subr.mxu0 0.0
      %549 = vmatpush2.msra.mxu0 0.0
      %550 = vmatprep.subr.mxu0 0.0
      %551 = vmatpush2.msra.mxu0 0.0
      %552 = vmatprep.subr.mxu0 0.0
      %553 = vmatpush2.msra.mxu0 0.0
      %554 = vmatprep.subr.mxu0 0.0
      %555 = vmatpush2.msra.mxu0 0.0
      %556 = vmatprep.mubr.f32.mxu0 0.0
      %557 = vmatmul.mubr.f32.gmra.mxu0 %v490
      %v558 = vpop.f32.mrf.mxu0
      %v559 = vadd.f32 %v486, %v558
      %v560 = vpop.f32.mrf.mxu0
      %v561 = vadd.f32 %v486, %v560
      %562 = vdwg.mxu0
      %563 = vmatprep.subr.mxu0 0.0
      %564 = vmatpush1.msra.mxu0 0.0
      %565 = vmatprep.subr.mxu0 0.0
      %566 = vmatpush1.msra.mxu0 0.0
      %567 = vmatprep.subr.mxu0 0.0
      %568 = vmatpush1.msra.mxu0 0.0
      %569 = vmatprep.subr.mxu0 0.0
      %570 = vmatpush1.msra.mxu0 0.0
      %571 = vmatprep.subr.mxu0 0.0
      %572 = vmatpush1.msra.mxu0 0.0
      %573 = vmatprep.subr.mxu0 0.0
      %574 = vmatpush1.msra.mxu0 0.0
      %575 = vmatprep.subr.mxu0 0.0
      %576 = vmatpush1.msra.mxu0 0.0
      %577 = vmatprep.subr.mxu0 0.0
      %578 = vmatpush1.msra.mxu0 0.0
      %579 = vmatprep.subr.mxu0 0.0
      %580 = vmatpush1.msra.mxu0 0.0
      %581 = vmatprep.subr.mxu0 0.0
      %582 = vmatpush1.msra.mxu0 0.0
      %583 = vmatprep.subr.mxu0 0.0
      %584 = vmatpush1.msra.mxu0 0.0
      %585 = vmatprep.subr.mxu0 0.0
      %586 = vmatpush1.msra.mxu0 0.0
      %587 = vmatprep.subr.mxu0 0.0
      %588 = vmatpush1.msra.mxu0 %v477
      %589 = vmatprep.subr.mxu0 0.0
      %590 = vmatpush1.msra.mxu0 %v462
      %591 = vmatprep.subr.mxu0 0.0
      %592 = vmatpush1.msra.mxu0 %v447
      %593 = vmatprep.subr.mxu0 0.0
      %594 = vmatpush1.msra.mxu0 %v427
      %595 = vmatprep.subr.mxu0 0.0
      %596 = vmatpush2.msra.mxu0 0.0
      %597 = vmatprep.subr.mxu0 0.0
      %598 = vmatpush2.msra.mxu0 0.0
      %599 = vmatprep.subr.mxu0 0.0
      %600 = vmatpush2.msra.mxu0 0.0
      %601 = vmatprep.subr.mxu0 0.0
      %602 = vmatpush2.msra.mxu0 0.0
      %603 = vmatprep.subr.mxu0 0.0
      %604 = vmatpush2.msra.mxu0 0.0
      %605 = vmatprep.subr.mxu0 0.0
      %606 = vmatpush2.msra.mxu0 0.0
      %607 = vmatprep.subr.mxu0 0.0
      %608 = vmatpush2.msra.mxu0 0.0
      %609 = vmatprep.subr.mxu0 0.0
      %610 = vmatpush2.msra.mxu0 0.0
      %611 = vmatprep.subr.mxu0 0.0
      %612 = vmatpush2.msra.mxu0 0.0
      %613 = vmatprep.subr.mxu0 0.0
      %614 = vmatpush2.msra.mxu0 0.0
      %615 = vmatprep.subr.mxu0 0.0
      %616 = vmatpush2.msra.mxu0 0.0
      %617 = vmatprep.subr.mxu0 0.0
      %618 = vmatpush2.msra.mxu0 0.0
      %619 = vmatprep.subr.mxu0 0.0
      %620 = vmatpush2.msra.mxu0 0.0
      %621 = vmatprep.subr.mxu0 0.0
      %622 = vmatpush2.msra.mxu0 0.0
      %623 = vmatprep.subr.mxu0 0.0
      %624 = vmatpush2.msra.mxu0 0.0
      %625 = vmatprep.subr.mxu0 0.0
      %626 = vmatpush2.msra.mxu0 0.0
      %627 = vmatprep.mubr.f32.mxu0 0.0
      %628 = vmatmul.mubr.f32.gmra.mxu0 %v490
      %v629 = vpop.f32.mrf.mxu0
      %v630 = vadd.f32 %v486, %v629
      %v631 = vpop.f32.mrf.mxu0
      %632 = vdwg.mxu0
      %v633 = vmul.f32 %v559, 0.01
      %v634 = vmul.f32 %v561, 0.01
      %v635 = vmul.f32 %v630, 0.01
      %v636 = vmax.f32 %v559, %v633
      %v637 = vmax.f32 %v561, %v634
      %v638 = vmax.f32 %v630, %v635
      %v639 = vld [vmem:[%s5] sm:$0x7]
      %v641 = vlaneseq
      %v642 = vshrl.u32 %v641, 7
      %v643 = vsub.s32 0, %v642
      %v644 = vrot.slane %v639, %v643
      %v645 = vlaneseq
      %v646 = vshrl.u32 %v645, 7
      %v647 = vsub.s32 1, %v646
      %v648 = vrot.slane %v639, %v647
      %v649 = vlaneseq
      %v650 = vshrl.u32 %v649, 7
      %v651 = vsub.s32 2, %v650
      %v652 = vrot.slane %v639, %v651
      %v656 = vmul.f32 %v636, %v644
      %v657 = vmul.f32 %v637, %v648
      %v658 = vmul.f32 %v638, %v652
      %659 = vst [vmem:[#allocation3 + $0x8] sm:$0xff] %v656
      %660 = vst [vmem:[#allocation3 + $0x10] sm:$0xff] %v657
      %661 = vst [vmem:[#allocation3 + $0x18] sm:$0xff] %v658
      %v662 = vld [vmem:[#allocation3] sm:$0xff]
      %v663 = vld [vmem:[#allocation3 + $0x8] sm:$0xff]
      %v664 = vld [vmem:[#allocation3 + $0x10] sm:$0xff]
      %v665 = vld [vmem:[#allocation3 + $0x18] sm:$0xff]
      %670 = vrot.lane.b32.xlu0 %v662, 127
      %v671 = vpop.permute.xlu0 %670
      %672 = vrot.lane.b32.xlu0 %v663, 127
      %v673 = vpop.permute.xlu0 %672
      %674 = vrot.lane.b32.xlu0 %v664, 127
      %v675 = vpop.permute.xlu0 %674
      %676 = vrot.lane.b32.xlu0 %v665, 127
      %v677 = vpop.permute.xlu0 %676
      %v678 = vsel %vm444, %v671, %v673
      %v679 = vsel %vm444, %v673, %v675
      %v680 = vsel %vm444, %v675, %v677
      %681 = vrot.lane.b32.xlu0 %v662, 110
      %v682 = vpop.permute.xlu0 %681
      %683 = vrot.lane.b32.xlu0 %v663, 110
      %v684 = vpop.permute.xlu0 %683
      %685 = vrot.lane.b32.xlu0 %v664, 110
      %v686 = vpop.permute.xlu0 %685
      %687 = vrot.lane.b32.xlu0 %v665, 110
      %v688 = vpop.permute.xlu0 %687
      %v689 = vsel %vm459, %v682, %v684
      %v690 = vsel %vm459, %v684, %v686
      %v691 = vsel %vm459, %v686, %v688
      %692 = vrot.lane.b32.xlu0 %v663, 109
      %v693 = vpop.permute.xlu0 %692
      %694 = vrot.lane.b32.xlu0 %v664, 109
      %v695 = vpop.permute.xlu0 %694
      %696 = vrot.lane.b32.xlu0 %v665, 109
      %v697 = vpop.permute.xlu0 %696
      %v698 = vsel %vm474, %v693, %v695
      %v699 = vsel %vm474, %v695, %v697
      %v700 = vld [vmem:[%s3] sm:$0xff]
      %v701 = vld [vmem:[%s4] sm:$0xff]
      %703 = vset.pattern.permute.xlu0 0
      %704 = vperm.xlu0 %703, %v701
      %v705 = vpop.permute.xlu0 %704
      %707 = vrot.lane.b32.xlu0 %v662, 19
      %v708 = vpop.permute.xlu0 %707
      %709 = vrot.lane.b32.xlu0 %v663, 19
      %v710 = vpop.permute.xlu0 %709
      %711 = vrot.lane.b32.xlu0 %v664, 19
      %v712 = vpop.permute.xlu0 %711
      %713 = vrot.lane.b32.xlu0 %v665, 19
      %v714 = vpop.permute.xlu0 %713
      %715 = vrot.lane.b32.xlu0 %v678, 19
      %v716 = vpop.permute.xlu0 %715
      %717 = vrot.lane.b32.xlu0 %v679, 19
      %v718 = vpop.permute.xlu0 %717
      %719 = vrot.lane.b32.xlu0 %v680, 19
      %v720 = vpop.permute.xlu0 %719
      %721 = vrot.lane.b32.xlu0 %v677, 19
      %v722 = vpop.permute.xlu0 %721
      %723 = vrot.lane.b32.xlu0 %v689, 19
      %v724 = vpop.permute.xlu0 %723
      %725 = vrot.lane.b32.xlu0 %v690, 19
      %v726 = vpop.permute.xlu0 %725
      %727 = vrot.lane.b32.xlu0 %v691, 19
      %v728 = vpop.permute.xlu0 %727
      %729 = vrot.lane.b32.xlu0 %v688, 19
      %v730 = vpop.permute.xlu0 %729
      %731 = vrot.lane.b32.xlu0 %v693, 19
      %v732 = vpop.permute.xlu0 %731
      %733 = vrot.lane.b32.xlu0 %v698, 19
      %v734 = vpop.permute.xlu0 %733
      %735 = vrot.lane.b32.xlu0 %v699, 19
      %v736 = vpop.permute.xlu0 %735
      %737 = vrot.lane.b32.xlu0 %v697, 19
      %v738 = vpop.permute.xlu0 %737
      %vm739 = vcmask 154624
      %v740 = vsel %vm739, %v708, %v710
      %v741 = vsel %vm739, %v710, %v712
      %v742 = vsel %vm739, %v712, %v714
      %v743 = vsel %vm739, %v716, %v718
      %v744 = vsel %vm739, %v718, %v720
      %v745 = vsel %vm739, %v720, %v722
      %v746 = vsel %vm739, %v724, %v726
      %v747 = vsel %vm739, %v726, %v728
      %v748 = vsel %vm739, %v728, %v730
      %v749 = vsel %vm739, %v732, %v734
      %v750 = vsel %vm739, %v734, %v736
      %v751 = vsel %vm739, %v736, %v738
      %v765 = vsel %vm488, %v700, 0
      %767 = vmatprep.subr.mxu0 0.0
      %768 = vmatpush1.msra.mxu0 0.0
      %769 = vmatprep.subr.mxu0 0.0
      %770 = vmatpush1.msra.mxu0 0.0
      %771 = vmatprep.subr.mxu0 0.0
      %772 = vmatpush1.msra.mxu0 0.0
      %773 = vmatprep.subr.mxu0 0.0
      %774 = vmatpush1.msra.mxu0 0.0
      %775 = vmatprep.subr.mxu0 0.0
      %776 = vmatpush1.msra.mxu0 0.0
      %777 = vmatprep.subr.mxu0 0.0
      %778 = vmatpush1.msra.mxu0 0.0
      %779 = vmatprep.subr.mxu0 0.0
      %780 = vmatpush1.msra.mxu0 0.0
      %781 = vmatprep.subr.mxu0 0.0
      %782 = vmatpush1.msra.mxu0 0.0
      %783 = vmatprep.subr.mxu0 0.0
      %784 = vmatpush1.msra.mxu0 0.0
      %785 = vmatprep.subr.mxu0 0.0
      %786 = vmatpush1.msra.mxu0 0.0
      %787 = vmatprep.subr.mxu0 0.0
      %788 = vmatpush1.msra.mxu0 0.0
      %789 = vmatprep.subr.mxu0 0.0
      %790 = vmatpush1.msra.mxu0 0.0
      %791 = vmatprep.subr.mxu0 %v750
      %792 = vmatpush1.msra.mxu0 %v749
      %793 = vmatprep.subr.mxu0 %v747
      %794 = vmatpush1.msra.mxu0 %v746
      %795 = vmatprep.subr.mxu0 %v744
      %796 = vmatpush1.msra.mxu0 %v743
      %797 = vmatprep.subr.mxu0 %v741
      %798 = vmatpush1.msra.mxu0 %v740
      %799 = vmatprep.subr.mxu0 0.0
      %800 = vmatpush2.msra.mxu0 0.0
      %801 = vmatprep.subr.mxu0 0.0
      %802 = vmatpush2.msra.mxu0 0.0
      %803 = vmatprep.subr.mxu0 0.0
      %804 = vmatpush2.msra.mxu0 0.0
      %805 = vmatprep.subr.mxu0 0.0
      %806 = vmatpush2.msra.mxu0 0.0
      %807 = vmatprep.subr.mxu0 0.0
      %808 = vmatpush2.msra.mxu0 0.0
      %809 = vmatprep.subr.mxu0 0.0
      %810 = vmatpush2.msra.mxu0 0.0
      %811 = vmatprep.subr.mxu0 0.0
      %812 = vmatpush2.msra.mxu0 0.0
      %813 = vmatprep.subr.mxu0 0.0
      %814 = vmatpush2.msra.mxu0 0.0
      %815 = vmatprep.subr.mxu0 0.0
      %816 = vmatpush2.msra.mxu0 0.0
      %817 = vmatprep.subr.mxu0 0.0
      %818 = vmatpush2.msra.mxu0 0.0
      %819 = vmatprep.subr.mxu0 0.0
      %820 = vmatpush2.msra.mxu0 0.0
      %821 = vmatprep.subr.mxu0 0.0
      %822 = vmatpush2.msra.mxu0 0.0
      %823 = vmatprep.subr.mxu0 0.0
      %824 = vmatpush2.msra.mxu0 0.0
      %825 = vmatprep.subr.mxu0 0.0
      %826 = vmatpush2.msra.mxu0 0.0
      %827 = vmatprep.subr.mxu0 0.0
      %828 = vmatpush2.msra.mxu0 0.0
      %829 = vmatprep.subr.mxu0 0.0
      %830 = vmatpush2.msra.mxu0 0.0
      %831 = vmatprep.mubr.f32.mxu0 0.0
      %832 = vmatmul.mubr.f32.gmra.mxu0 %v765
      %v833 = vpop.f32.mrf.mxu0
      %v834 = vadd.f32 %v705, %v833
      %v835 = vpop.f32.mrf.mxu0
      %v836 = vadd.f32 %v705, %v835
      %837 = vdwg.mxu0
      %838 = vmatprep.subr.mxu0 0.0
      %839 = vmatpush1.msra.mxu0 0.0
      %840 = vmatprep.subr.mxu0 0.0
      %841 = vmatpush1.msra.mxu0 0.0
      %842 = vmatprep.subr.mxu0 0.0
      %843 = vmatpush1.msra.mxu0 0.0
      %844 = vmatprep.subr.mxu0 0.0
      %845 = vmatpush1.msra.mxu0 0.0
      %846 = vmatprep.subr.mxu0 0.0
      %847 = vmatpush1.msra.mxu0 0.0
      %848 = vmatprep.subr.mxu0 0.0
      %849 = vmatpush1.msra.mxu0 0.0
      %850 = vmatprep.subr.mxu0 0.0
      %851 = vmatpush1.msra.mxu0 0.0
      %852 = vmatprep.subr.mxu0 0.0
      %853 = vmatpush1.msra.mxu0 0.0
      %854 = vmatprep.subr.mxu0 0.0
      %855 = vmatpush1.msra.mxu0 0.0
      %856 = vmatprep.subr.mxu0 0.0
      %857 = vmatpush1.msra.mxu0 0.0
      %858 = vmatprep.subr.mxu0 0.0
      %859 = vmatpush1.msra.mxu0 0.0
      %860 = vmatprep.subr.mxu0 0.0
      %861 = vmatpush1.msra.mxu0 0.0
      %862 = vmatprep.subr.mxu0 0.0
      %863 = vmatpush1.msra.mxu0 %v751
      %864 = vmatprep.subr.mxu0 0.0
      %865 = vmatpush1.msra.mxu0 %v748
      %866 = vmatprep.subr.mxu0 0.0
      %867 = vmatpush1.msra.mxu0 %v745
      %868 = vmatprep.subr.mxu0 0.0
      %869 = vmatpush1.msra.mxu0 %v742
      %870 = vmatprep.subr.mxu0 0.0
      %871 = vmatpush2.msra.mxu0 0.0
      %872 = vmatprep.subr.mxu0 0.0
      %873 = vmatpush2.msra.mxu0 0.0
      %874 = vmatprep.subr.mxu0 0.0
      %875 = vmatpush2.msra.mxu0 0.0
      %876 = vmatprep.subr.mxu0 0.0
      %877 = vmatpush2.msra.mxu0 0.0
      %878 = vmatprep.subr.mxu0 0.0
      %879 = vmatpush2.msra.mxu0 0.0
      %880 = vmatprep.subr.mxu0 0.0
      %881 = vmatpush2.msra.mxu0 0.0
      %882 = vmatprep.subr.mxu0 0.0
      %883 = vmatpush2.msra.mxu0 0.0
      %884 = vmatprep.subr.mxu0 0.0
      %885 = vmatpush2.msra.mxu0 0.0
      %886 = vmatprep.subr.mxu0 0.0
      %887 = vmatpush2.msra.mxu0 0.0
      %888 = vmatprep.subr.mxu0 0.0
      %889 = vmatpush2.msra.mxu0 0.0
      %890 = vmatprep.subr.mxu0 0.0
      %891 = vmatpush2.msra.mxu0 0.0
      %892 = vmatprep.subr.mxu0 0.0
      %893 = vmatpush2.msra.mxu0 0.0
      %894 = vmatprep.subr.mxu0 0.0
      %895 = vmatpush2.msra.mxu0 0.0
      %896 = vmatprep.subr.mxu0 0.0
      %897 = vmatpush2.msra.mxu0 0.0
      %898 = vmatprep.subr.mxu0 0.0
      %899 = vmatpush2.msra.mxu0 0.0
      %900 = vmatprep.subr.mxu0 0.0
      %901 = vmatpush2.msra.mxu0 0.0
      %902 = vmatprep.mubr.f32.mxu0 0.0
      %903 = vmatmul.mubr.f32.gmra.mxu0 %v765
      %v904 = vpop.f32.mrf.mxu0
      %v905 = vadd.f32 %v705, %v904
      %v906 = vpop.f32.mrf.mxu0
      %907 = vdwg.mxu0
      %v909 = vlaneseq
      %v910 = vshrl.u32 %v909, 7
      %v911 = vsub.s32 0, %v910
      %v912 = vrot.slane %v418, %v911
      %v913 = vlaneseq
      %v914 = vshrl.u32 %v913, 7
      %v915 = vsub.s32 1, %v914
      %v916 = vrot.slane %v418, %v915
      %v917 = vlaneseq
      %v918 = vshrl.u32 %v917, 7
      %v919 = vsub.s32 2, %v918
      %v920 = vrot.slane %v418, %v919
      %v924 = vmul.f32 %v834, %v912
      %v925 = vmul.f32 %v836, %v916
      %v926 = vmul.f32 %v905, %v920
      %v927 = vadd.f32 %v924, %v419
      %v928 = vadd.f32 %v925, %v420
      %v929 = vadd.f32 %v926, %v421
      %930 = vst [vmem:[%s413] sm:$0xff] %v927
      %931 = vst [vmem:[%s413 + $0x8] sm:$0xff] %v928
      %932 = vst [vmem:[%s413 + $0x10] sm:$0xff] %v929
      %933 = vst [vmem:[#allocation2 + $0x8] sm:$0xff] %v927
      %934 = vst [vmem:[#allocation2 + $0x10] sm:$0xff] %v928
      %935 = vst [vmem:[#allocation2 + $0x18] sm:$0xff] %v929
      %v936 = vld [vmem:[#allocation2] sm:$0xff]
      %v937 = vld [vmem:[#allocation2 + $0x8] sm:$0xff]
      %v938 = vld [vmem:[#allocation2 + $0x10] sm:$0xff]
      %v939 = vld [vmem:[#allocation2 + $0x18] sm:$0xff]
      %v940 = vld [vmem:[#allocation2 + $0x8] sm:$0xff]
      %v941 = vld [vmem:[#allocation2 + $0x10] sm:$0xff]
      %v942 = vld [vmem:[#allocation2 + $0x18] sm:$0xff]
      %v943 = vld [vmem:[#allocation2 + $0x20] sm:$0xff]
      %948 = vrot.lane.b32.xlu0 %v936, 127
      %v949 = vpop.permute.xlu0 %948
      %950 = vrot.lane.b32.xlu0 %v937, 127
      %v951 = vpop.permute.xlu0 %950
      %952 = vrot.lane.b32.xlu0 %v938, 127
      %v953 = vpop.permute.xlu0 %952
      %954 = vrot.lane.b32.xlu0 %v939, 127
      %v955 = vpop.permute.xlu0 %954
      %v956 = vsel %vm444, %v949, %v951
      %v957 = vsel %vm444, %v951, %v953
      %v958 = vsel %vm444, %v953, %v955
      %959 = vrot.lane.b32.xlu0 %v936, 126
      %v960 = vpop.permute.xlu0 %959
      %961 = vrot.lane.b32.xlu0 %v937, 126
      %v962 = vpop.permute.xlu0 %961
      %963 = vrot.lane.b32.xlu0 %v938, 126
      %v964 = vpop.permute.xlu0 %963
      %965 = vrot.lane.b32.xlu0 %v939, 126
      %v966 = vpop.permute.xlu0 %965
      %vm967 = vcmask 1031168
      %v968 = vsel %vm967, %v960, %v962
      %v969 = vsel %vm967, %v962, %v964
      %v970 = vsel %vm967, %v964, %v966
      %971 = vrot.lane.b32.xlu0 %v936, 110
      %v972 = vpop.permute.xlu0 %971
      %973 = vrot.lane.b32.xlu0 %v937, 110
      %v974 = vpop.permute.xlu0 %973
      %975 = vrot.lane.b32.xlu0 %v938, 110
      %v976 = vpop.permute.xlu0 %975
      %977 = vrot.lane.b32.xlu0 %v939, 110
      %v978 = vpop.permute.xlu0 %977
      %v979 = vsel %vm459, %v972, %v974
      %v980 = vsel %vm459, %v974, %v976
      %v981 = vsel %vm459, %v976, %v978
      %982 = vrot.lane.b32.xlu0 %v937, 109
      %v983 = vpop.permute.xlu0 %982
      %984 = vrot.lane.b32.xlu0 %v938, 109
      %v985 = vpop.permute.xlu0 %984
      %986 = vrot.lane.b32.xlu0 %v939, 109
      %v987 = vpop.permute.xlu0 %986
      %v988 = vsel %vm474, %v983, %v985
      %v989 = vsel %vm474, %v985, %v987
      %994 = vrot.lane.b32.xlu0 %v940, 108
      %v995 = vpop.permute.xlu0 %994
      %996 = vrot.lane.b32.xlu0 %v941, 108
      %v997 = vpop.permute.xlu0 %996
      %998 = vrot.lane.b32.xlu0 %v942, 108
      %v999 = vpop.permute.xlu0 %998
      %1000 = vrot.lane.b32.xlu0 %v943, 108
      %v1001 = vpop.permute.xlu0 %1000
      %vm1002 = vcmask 883712
      %v1003 = vsel %vm1002, %v995, %v997
      %v1004 = vsel %vm1002, %v997, %v999
      %v1005 = vsel %vm1002, %v999, %v1001
      %1006 = vrot.lane.b32.xlu0 %v940, 92
      %v1007 = vpop.permute.xlu0 %1006
      %1008 = vrot.lane.b32.xlu0 %v941, 92
      %v1009 = vpop.permute.xlu0 %1008
      %1010 = vrot.lane.b32.xlu0 %v942, 92
      %v1011 = vpop.permute.xlu0 %1010
      %1012 = vrot.lane.b32.xlu0 %v943, 92
      %v1013 = vpop.permute.xlu0 %1012
      %vm1014 = vcmask 752640
      %v1015 = vsel %vm1014, %v1007, %v1009
      %v1016 = vsel %vm1014, %v1009, %v1011
      %v1017 = vsel %vm1014, %v1011, %v1013
      %1018 = vrot.lane.b32.xlu0 %v940, 91
      %v1019 = vpop.permute.xlu0 %1018
      %1020 = vrot.lane.b32.xlu0 %v941, 91
      %v1021 = vpop.permute.xlu0 %1020
      %1022 = vrot.lane.b32.xlu0 %v942, 91
      %v1023 = vpop.permute.xlu0 %1022
      %1024 = vrot.lane.b32.xlu0 %v943, 91
      %v1025 = vpop.permute.xlu0 %1024
      %vm1026 = vcmask 744448
      %v1027 = vsel %vm1026, %v1019, %v1021
      %v1028 = vsel %vm1026, %v1021, %v1023
      %v1029 = vsel %vm1026, %v1023, %v1025
      %1030 = vrot.lane.b32.xlu0 %v940, 90
      %v1031 = vpop.permute.xlu0 %1030
      %1032 = vrot.lane.b32.xlu0 %v941, 90
      %v1033 = vpop.permute.xlu0 %1032
      %1034 = vrot.lane.b32.xlu0 %v942, 90
      %v1035 = vpop.permute.xlu0 %1034
      %1036 = vrot.lane.b32.xlu0 %v943, 90
      %v1037 = vpop.permute.xlu0 %1036
      %vm1038 = vcmask 736256
      %v1039 = vsel %vm1038, %v1031, %v1033
      %v1040 = vsel %vm1038, %v1033, %v1035
      %v1041 = vsel %vm1038, %v1035, %v1037
      %v1042 = vld [vmem:[%s6] sm:$0xff]
      %v1043 = vld [vmem:[%s7] sm:$0xff]
      %1045 = vset.pattern.permute.xlu0 0
      %1046 = vperm.xlu0 %1045, %v1043
      %v1047 = vpop.permute.xlu0 %1046
      %1049 = vrot.lane.b32.xlu0 %v936, 19
      %v1050 = vpop.permute.xlu0 %1049
      %1051 = vrot.lane.b32.xlu0 %v937, 19
      %v1052 = vpop.permute.xlu0 %1051
      %1053 = vrot.lane.b32.xlu0 %v938, 19
      %v1054 = vpop.permute.xlu0 %1053
      %1055 = vrot.lane.b32.xlu0 %v939, 19
      %v1056 = vpop.permute.xlu0 %1055
      %1057 = vrot.lane.b32.xlu0 %v956, 19
      %v1058 = vpop.permute.xlu0 %1057
      %1059 = vrot.lane.b32.xlu0 %v957, 19
      %v1060 = vpop.permute.xlu0 %1059
      %1061 = vrot.lane.b32.xlu0 %v958, 19
      %v1062 = vpop.permute.xlu0 %1061
      %1063 = vrot.lane.b32.xlu0 %v955, 19
      %v1064 = vpop.permute.xlu0 %1063
      %1065 = vrot.lane.b32.xlu0 %v968, 19
      %v1066 = vpop.permute.xlu0 %1065
      %1067 = vrot.lane.b32.xlu0 %v969, 19
      %v1068 = vpop.permute.xlu0 %1067
      %1069 = vrot.lane.b32.xlu0 %v970, 19
      %v1070 = vpop.permute.xlu0 %1069
      %1071 = vrot.lane.b32.xlu0 %v966, 19
      %v1072 = vpop.permute.xlu0 %1071
      %1073 = vrot.lane.b32.xlu0 %v979, 19
      %v1074 = vpop.permute.xlu0 %1073
      %1075 = vrot.lane.b32.xlu0 %v980, 19
      %v1076 = vpop.permute.xlu0 %1075
      %1077 = vrot.lane.b32.xlu0 %v981, 19
      %v1078 = vpop.permute.xlu0 %1077
      %1079 = vrot.lane.b32.xlu0 %v978, 19
      %v1080 = vpop.permute.xlu0 %1079
      %1081 = vrot.lane.b32.xlu0 %v983, 19
      %v1082 = vpop.permute.xlu0 %1081
      %1083 = vrot.lane.b32.xlu0 %v988, 19
      %v1084 = vpop.permute.xlu0 %1083
      %1085 = vrot.lane.b32.xlu0 %v989, 19
      %v1086 = vpop.permute.xlu0 %1085
      %1087 = vrot.lane.b32.xlu0 %v987, 19
      %v1088 = vpop.permute.xlu0 %1087
      %1089 = vrot.lane.b32.xlu0 %v995, 19
      %v1090 = vpop.permute.xlu0 %1089
      %1091 = vrot.lane.b32.xlu0 %v1003, 19
      %v1092 = vpop.permute.xlu0 %1091
      %1093 = vrot.lane.b32.xlu0 %v1004, 19
      %v1094 = vpop.permute.xlu0 %1093
      %1095 = vrot.lane.b32.xlu0 %v1005, 19
      %v1096 = vpop.permute.xlu0 %1095
      %1097 = vrot.lane.b32.xlu0 %v1007, 19
      %v1098 = vpop.permute.xlu0 %1097
      %1099 = vrot.lane.b32.xlu0 %v1015, 19
      %v1100 = vpop.permute.xlu0 %1099
      %1101 = vrot.lane.b32.xlu0 %v1016, 19
      %v1102 = vpop.permute.xlu0 %1101
      %1103 = vrot.lane.b32.xlu0 %v1017, 19
      %v1104 = vpop.permute.xlu0 %1103
      %1105 = vrot.lane.b32.xlu0 %v1019, 19
      %v1106 = vpop.permute.xlu0 %1105
      %1107 = vrot.lane.b32.xlu0 %v1027, 19
      %v1108 = vpop.permute.xlu0 %1107
      %1109 = vrot.lane.b32.xlu0 %v1028, 19
      %v1110 = vpop.permute.xlu0 %1109
      %1111 = vrot.lane.b32.xlu0 %v1029, 19
      %v1112 = vpop.permute.xlu0 %1111
      %1113 = vrot.lane.b32.xlu0 %v1031, 19
      %v1114 = vpop.permute.xlu0 %1113
      %1115 = vrot.lane.b32.xlu0 %v1039, 19
      %v1116 = vpop.permute.xlu0 %1115
      %1117 = vrot.lane.b32.xlu0 %v1040, 19
      %v1118 = vpop.permute.xlu0 %1117
      %1119 = vrot.lane.b32.xlu0 %v1041, 19
      %v1120 = vpop.permute.xlu0 %1119
      %v1121 = vsel %vm739, %v1050, %v1052
      %v1122 = vsel %vm739, %v1052, %v1054
      %v1123 = vsel %vm739, %v1054, %v1056
      %v1124 = vsel %vm739, %v1058, %v1060
      %v1125 = vsel %vm739, %v1060, %v1062
      %v1126 = vsel %vm739, %v1062, %v1064
      %v1127 = vsel %vm739, %v1066, %v1068
      %v1128 = vsel %vm739, %v1068, %v1070
      %v1129 = vsel %vm739, %v1070, %v1072
      %v1130 = vsel %vm739, %v1074, %v1076
      %v1131 = vsel %vm739, %v1076, %v1078
      %v1132 = vsel %vm739, %v1078, %v1080
      %v1133 = vsel %vm739, %v1082, %v1084
      %v1134 = vsel %vm739, %v1084, %v1086
      %v1135 = vsel %vm739, %v1086, %v1088
      %v1136 = vsel %vm739, %v1090, %v1092
      %v1137 = vsel %vm739, %v1092, %v1094
      %v1138 = vsel %vm739, %v1094, %v1096
      %v1139 = vsel %vm739, %v1098, %v1100
      %v1140 = vsel %vm739, %v1100, %v1102
      %v1141 = vsel %vm739, %v1102, %v1104
      %v1142 = vsel %vm739, %v1106, %v1108
      %v1143 = vsel %vm739, %v1108, %v1110
      %v1144 = vsel %vm739, %v1110, %v1112
      %v1145 = vsel %vm739, %v1114, %v1116
      %v1146 = vsel %vm739, %v1116, %v1118
      %v1147 = vsel %vm739, %v1118, %v1120
      %vm1175 = vcmask 588800
      %v1177 = vsel %vm1175, %v1042, 0
      %1179 = vmatprep.subr.mxu0 0.0
      %1180 = vmatpush1.msra.mxu0 0.0
      %1181 = vmatprep.subr.mxu0 0.0
      %1182 = vmatpush1.msra.mxu0 0.0
      %1183 = vmatprep.subr.mxu0 0.0
      %1184 = vmatpush1.msra.mxu0 0.0
      %1185 = vmatprep.subr.mxu0 0.0
      %1186 = vmatpush1.msra.mxu0 0.0
      %1187 = vmatprep.subr.mxu0 0.0
      %1188 = vmatpush1.msra.mxu0 0.0
      %1189 = vmatprep.subr.mxu0 0.0
      %1190 = vmatpush1.msra.mxu0 0.0
      %1191 = vmatprep.subr.mxu0 0.0
      %1192 = vmatpush1.msra.mxu0 0.0
      %1193 = vmatprep.subr.mxu0 %v1146
      %1194 = vmatpush1.msra.mxu0 %v1145
      %1195 = vmatprep.subr.mxu0 %v1143
      %1196 = vmatpush1.msra.mxu0 %v1142
      %1197 = vmatprep.subr.mxu0 %v1140
      %1198 = vmatpush1.msra.mxu0 %v1139
      %1199 = vmatprep.subr.mxu0 %v1137
      %1200 = vmatpush1.msra.mxu0 %v1136
      %1201 = vmatprep.subr.mxu0 %v1134
      %1202 = vmatpush1.msra.mxu0 %v1133
      %1203 = vmatprep.subr.mxu0 %v1131
      %1204 = vmatpush1.msra.mxu0 %v1130
      %1205 = vmatprep.subr.mxu0 %v1128
      %1206 = vmatpush1.msra.mxu0 %v1127
      %1207 = vmatprep.subr.mxu0 %v1125
      %1208 = vmatpush1.msra.mxu0 %v1124
      %1209 = vmatprep.subr.mxu0 %v1122
      %1210 = vmatpush1.msra.mxu0 %v1121
      %1211 = vmatprep.subr.mxu0 0.0
      %1212 = vmatpush2.msra.mxu0 0.0
      %1213 = vmatprep.subr.mxu0 0.0
      %1214 = vmatpush2.msra.mxu0 0.0
      %1215 = vmatprep.subr.mxu0 0.0
      %1216 = vmatpush2.msra.mxu0 0.0
      %1217 = vmatprep.subr.mxu0 0.0
      %1218 = vmatpush2.msra.mxu0 0.0
      %1219 = vmatprep.subr.mxu0 0.0
      %1220 = vmatpush2.msra.mxu0 0.0
      %1221 = vmatprep.subr.mxu0 0.0
      %1222 = vmatpush2.msra.mxu0 0.0
      %1223 = vmatprep.subr.mxu0 0.0
      %1224 = vmatpush2.msra.mxu0 0.0
      %1225 = vmatprep.subr.mxu0 0.0
      %1226 = vmatpush2.msra.mxu0 0.0
      %1227 = vmatprep.subr.mxu0 0.0
      %1228 = vmatpush2.msra.mxu0 0.0
      %1229 = vmatprep.subr.mxu0 0.0
      %1230 = vmatpush2.msra.mxu0 0.0
      %1231 = vmatprep.subr.mxu0 0.0
      %1232 = vmatpush2.msra.mxu0 0.0
      %1233 = vmatprep.subr.mxu0 0.0
      %1234 = vmatpush2.msra.mxu0 0.0
      %1235 = vmatprep.subr.mxu0 0.0
      %1236 = vmatpush2.msra.mxu0 0.0
      %1237 = vmatprep.subr.mxu0 0.0
      %1238 = vmatpush2.msra.mxu0 0.0
      %1239 = vmatprep.subr.mxu0 0.0
      %1240 = vmatpush2.msra.mxu0 0.0
      %1241 = vmatprep.subr.mxu0 0.0
      %1242 = vmatpush2.msra.mxu0 0.0
      %1243 = vmatprep.mubr.f32.mxu0 0.0
      %1244 = vmatmul.mubr.f32.gmra.mxu0 %v1177
      %v1245 = vpop.f32.mrf.mxu0
      %v1246 = vadd.f32 %v1047, %v1245
      %v1247 = vpop.f32.mrf.mxu0
      %v1248 = vadd.f32 %v1047, %v1247
      %1249 = vdwg.mxu0
      %1250 = vmatprep.subr.mxu0 0.0
      %1251 = vmatpush1.msra.mxu0 0.0
      %1252 = vmatprep.subr.mxu0 0.0
      %1253 = vmatpush1.msra.mxu0 0.0
      %1254 = vmatprep.subr.mxu0 0.0
      %1255 = vmatpush1.msra.mxu0 0.0
      %1256 = vmatprep.subr.mxu0 0.0
      %1257 = vmatpush1.msra.mxu0 0.0
      %1258 = vmatprep.subr.mxu0 0.0
      %1259 = vmatpush1.msra.mxu0 0.0
      %1260 = vmatprep.subr.mxu0 0.0
      %1261 = vmatpush1.msra.mxu0 0.0
      %1262 = vmatprep.subr.mxu0 0.0
      %1263 = vmatpush1.msra.mxu0 0.0
      %1264 = vmatprep.subr.mxu0 0.0
      %1265 = vmatpush1.msra.mxu0 %v1147
      %1266 = vmatprep.subr.mxu0 0.0
      %1267 = vmatpush1.msra.mxu0 %v1144
      %1268 = vmatprep.subr.mxu0 0.0
      %1269 = vmatpush1.msra.mxu0 %v1141
      %1270 = vmatprep.subr.mxu0 0.0
      %1271 = vmatpush1.msra.mxu0 %v1138
      %1272 = vmatprep.subr.mxu0 0.0
      %1273 = vmatpush1.msra.mxu0 %v1135
      %1274 = vmatprep.subr.mxu0 0.0
      %1275 = vmatpush1.msra.mxu0 %v1132
      %1276 = vmatprep.subr.mxu0 0.0
      %1277 = vmatpush1.msra.mxu0 %v1129
      %1278 = vmatprep.subr.mxu0 0.0
      %1279 = vmatpush1.msra.mxu0 %v1126
      %1280 = vmatprep.subr.mxu0 0.0
      %1281 = vmatpush1.msra.mxu0 %v1123
      %1282 = vmatprep.subr.mxu0 0.0
      %1283 = vmatpush2.msra.mxu0 0.0
      %1284 = vmatprep.subr.mxu0 0.0
      %1285 = vmatpush2.msra.mxu0 0.0
      %1286 = vmatprep.subr.mxu0 0.0
      %1287 = vmatpush2.msra.mxu0 0.0
      %1288 = vmatprep.subr.mxu0 0.0
      %1289 = vmatpush2.msra.mxu0 0.0
      %1290 = vmatprep.subr.mxu0 0.0
      %1291 = vmatpush2.msra.mxu0 0.0
      %1292 = vmatprep.subr.mxu0 0.0
      %1293 = vmatpush2.msra.mxu0 0.0
      %1294 = vmatprep.subr.mxu0 0.0
      %1295 = vmatpush2.msra.mxu0 0.0
      %1296 = vmatprep.subr.mxu0 0.0
      %1297 = vmatpush2.msra.mxu0 0.0
      %1298 = vmatprep.subr.mxu0 0.0
      %1299 = vmatpush2.msra.mxu0 0.0
      %1300 = vmatprep.subr.mxu0 0.0
      %1301 = vmatpush2.msra.mxu0 0.0
      %1302 = vmatprep.subr.mxu0 0.0
      %1303 = vmatpush2.msra.mxu0 0.0
      %1304 = vmatprep.subr.mxu0 0.0
      %1305 = vmatpush2.msra.mxu0 0.0
      %1306 = vmatprep.subr.mxu0 0.0
      %1307 = vmatpush2.msra.mxu0 0.0
      %1308 = vmatprep.subr.mxu0 0.0
      %1309 = vmatpush2.msra.mxu0 0.0
      %1310 = vmatprep.subr.mxu0 0.0
      %1311 = vmatpush2.msra.mxu0 0.0
      %1312 = vmatprep.subr.mxu0 0.0
      %1313 = vmatpush2.msra.mxu0 0.0
      %1314 = vmatprep.mubr.f32.mxu0 0.0
      %1315 = vmatmul.mubr.f32.gmra.mxu0 %v1177
      %v1316 = vpop.f32.mrf.mxu0
      %v1317 = vadd.f32 %v1047, %v1316
      %v1318 = vpop.f32.mrf.mxu0
      %1319 = vdwg.mxu0
      %v1320 = vmul.f32 %v1246, 0.01
      %v1321 = vmul.f32 %v1248, 0.01
      %v1322 = vmul.f32 %v1317, 0.01
      %v1323 = vmax.f32 %v1246, %v1320
      %v1324 = vmax.f32 %v1248, %v1321
      %v1325 = vmax.f32 %v1317, %v1322
      %v1326 = vld [vmem:[%s10] sm:$0x7]
      %v1328 = vlaneseq
      %v1329 = vshrl.u32 %v1328, 7
      %v1330 = vsub.s32 0, %v1329
      %v1331 = vrot.slane %v1326, %v1330
      %v1332 = vlaneseq
      %v1333 = vshrl.u32 %v1332, 7
      %v1334 = vsub.s32 1, %v1333
      %v1335 = vrot.slane %v1326, %v1334
      %v1336 = vlaneseq
      %v1337 = vshrl.u32 %v1336, 7
      %v1338 = vsub.s32 2, %v1337
      %v1339 = vrot.slane %v1326, %v1338
      %v1343 = vmul.f32 %v1323, %v1331
      %v1344 = vmul.f32 %v1324, %v1335
      %v1345 = vmul.f32 %v1325, %v1339
      %1346 = vst [vmem:[#allocation3 + $0x8] sm:$0xff] %v1343
      %1347 = vst [vmem:[#allocation3 + $0x10] sm:$0xff] %v1344
      %1348 = vst [vmem:[#allocation3 + $0x18] sm:$0xff] %v1345
      %v1349 = vld [vmem:[#allocation3] sm:$0xff]
      %v1350 = vld [vmem:[#allocation3 + $0x8] sm:$0xff]
      %v1351 = vld [vmem:[#allocation3 + $0x10] sm:$0xff]
      %v1352 = vld [vmem:[#allocation3 + $0x18] sm:$0xff]
      %v1353 = vld [vmem:[#allocation3 + $0x8] sm:$0xff]
      %v1354 = vld [vmem:[#allocation3 + $0x10] sm:$0xff]
      %v1355 = vld [vmem:[#allocation3 + $0x18] sm:$0xff]
      %v1356 = vld [vmem:[#allocation3 + $0x20] sm:$0xff]
      %1361 = vrot.lane.b32.xlu0 %v1349, 127
      %v1362 = vpop.permute.xlu0 %1361
      %1363 = vrot.lane.b32.xlu0 %v1350, 127
      %v1364 = vpop.permute.xlu0 %1363
      %1365 = vrot.lane.b32.xlu0 %v1351, 127
      %v1366 = vpop.permute.xlu0 %1365
      %1367 = vrot.lane.b32.xlu0 %v1352, 127
      %v1368 = vpop.permute.xlu0 %1367
      %v1369 = vsel %vm444, %v1362, %v1364
      %v1370 = vsel %vm444, %v1364, %v1366
      %v1371 = vsel %vm444, %v1366, %v1368
      %1372 = vrot.lane.b32.xlu0 %v1349, 126
      %v1373 = vpop.permute.xlu0 %1372
      %1374 = vrot.lane.b32.xlu0 %v1350, 126
      %v1375 = vpop.permute.xlu0 %1374
      %1376 = vrot.lane.b32.xlu0 %v1351, 126
      %v1377 = vpop.permute.xlu0 %1376
      %1378 = vrot.lane.b32.xlu0 %v1352, 126
      %v1379 = vpop.permute.xlu0 %1378
      %v1380 = vsel %vm967, %v1373, %v1375
      %v1381 = vsel %vm967, %v1375, %v1377
      %v1382 = vsel %vm967, %v1377, %v1379
      %1383 = vrot.lane.b32.xlu0 %v1349, 110
      %v1384 = vpop.permute.xlu0 %1383
      %1385 = vrot.lane.b32.xlu0 %v1350, 110
      %v1386 = vpop.permute.xlu0 %1385
      %1387 = vrot.lane.b32.xlu0 %v1351, 110
      %v1388 = vpop.permute.xlu0 %1387
      %1389 = vrot.lane.b32.xlu0 %v1352, 110
      %v1390 = vpop.permute.xlu0 %1389
      %v1391 = vsel %vm459, %v1384, %v1386
      %v1392 = vsel %vm459, %v1386, %v1388
      %v1393 = vsel %vm459, %v1388, %v1390
      %1394 = vrot.lane.b32.xlu0 %v1350, 109
      %v1395 = vpop.permute.xlu0 %1394
      %1396 = vrot.lane.b32.xlu0 %v1351, 109
      %v1397 = vpop.permute.xlu0 %1396
      %1398 = vrot.lane.b32.xlu0 %v1352, 109
      %v1399 = vpop.permute.xlu0 %1398
      %v1400 = vsel %vm474, %v1395, %v1397
      %v1401 = vsel %vm474, %v1397, %v1399
      %1406 = vrot.lane.b32.xlu0 %v1353, 108
      %v1407 = vpop.permute.xlu0 %1406
      %1408 = vrot.lane.b32.xlu0 %v1354, 108
      %v1409 = vpop.permute.xlu0 %1408
      %1410 = vrot.lane.b32.xlu0 %v1355, 108
      %v1411 = vpop.permute.xlu0 %1410
      %1412 = vrot.lane.b32.xlu0 %v1356, 108
      %v1413 = vpop.permute.xlu0 %1412
      %v1414 = vsel %vm1002, %v1407, %v1409
      %v1415 = vsel %vm1002, %v1409, %v1411
      %v1416 = vsel %vm1002, %v1411, %v1413
      %1417 = vrot.lane.b32.xlu0 %v1353, 92
      %v1418 = vpop.permute.xlu0 %1417
      %1419 = vrot.lane.b32.xlu0 %v1354, 92
      %v1420 = vpop.permute.xlu0 %1419
      %1421 = vrot.lane.b32.xlu0 %v1355, 92
      %v1422 = vpop.permute.xlu0 %1421
      %1423 = vrot.lane.b32.xlu0 %v1356, 92
      %v1424 = vpop.permute.xlu0 %1423
      %v1425 = vsel %vm1014, %v1418, %v1420
      %v1426 = vsel %vm1014, %v1420, %v1422
      %v1427 = vsel %vm1014, %v1422, %v1424
      %1428 = vrot.lane.b32.xlu0 %v1353, 91
      %v1429 = vpop.permute.xlu0 %1428
      %1430 = vrot.lane.b32.xlu0 %v1354, 91
      %v1431 = vpop.permute.xlu0 %1430
      %1432 = vrot.lane.b32.xlu0 %v1355, 91
      %v1433 = vpop.permute.xlu0 %1432
      %1434 = vrot.lane.b32.xlu0 %v1356, 91
      %v1435 = vpop.permute.xlu0 %1434
      %v1436 = vsel %vm1026, %v1429, %v1431
      %v1437 = vsel %vm1026, %v1431, %v1433
      %v1438 = vsel %vm1026, %v1433, %v1435
      %1439 = vrot.lane.b32.xlu0 %v1353, 90
      %v1440 = vpop.permute.xlu0 %1439
      %1441 = vrot.lane.b32.xlu0 %v1354, 90
      %v1442 = vpop.permute.xlu0 %1441
      %1443 = vrot.lane.b32.xlu0 %v1355, 90
      %v1444 = vpop.permute.xlu0 %1443
      %1445 = vrot.lane.b32.xlu0 %v1356, 90
      %v1446 = vpop.permute.xlu0 %1445
      %v1447 = vsel %vm1038, %v1440, %v1442
      %v1448 = vsel %vm1038, %v1442, %v1444
      %v1449 = vsel %vm1038, %v1444, %v1446
      %v1450 = vld [vmem:[%s8] sm:$0xff]
      %v1451 = vld [vmem:[%s9] sm:$0xff]
      %1453 = vset.pattern.permute.xlu0 0
      %1454 = vperm.xlu0 %1453, %v1451
      %v1455 = vpop.permute.xlu0 %1454
      %1457 = vrot.lane.b32.xlu0 %v1349, 19
      %v1458 = vpop.permute.xlu0 %1457
      %1459 = vrot.lane.b32.xlu0 %v1350, 19
      %v1460 = vpop.permute.xlu0 %1459
      %1461 = vrot.lane.b32.xlu0 %v1351, 19
      %v1462 = vpop.permute.xlu0 %1461
      %1463 = vrot.lane.b32.xlu0 %v1352, 19
      %v1464 = vpop.permute.xlu0 %1463
      %1465 = vrot.lane.b32.xlu0 %v1369, 19
      %v1466 = vpop.permute.xlu0 %1465
      %1467 = vrot.lane.b32.xlu0 %v1370, 19
      %v1468 = vpop.permute.xlu0 %1467
      %1469 = vrot.lane.b32.xlu0 %v1371, 19
      %v1470 = vpop.permute.xlu0 %1469
      %1471 = vrot.lane.b32.xlu0 %v1368, 19
      %v1472 = vpop.permute.xlu0 %1471
      %1473 = vrot.lane.b32.xlu0 %v1380, 19
      %v1474 = vpop.permute.xlu0 %1473
      %1475 = vrot.lane.b32.xlu0 %v1381, 19
      %v1476 = vpop.permute.xlu0 %1475
      %1477 = vrot.lane.b32.xlu0 %v1382, 19
      %v1478 = vpop.permute.xlu0 %1477
      %1479 = vrot.lane.b32.xlu0 %v1379, 19
      %v1480 = vpop.permute.xlu0 %1479
      %1481 = vrot.lane.b32.xlu0 %v1391, 19
      %v1482 = vpop.permute.xlu0 %1481
      %1483 = vrot.lane.b32.xlu0 %v1392, 19
      %v1484 = vpop.permute.xlu0 %1483
      %1485 = vrot.lane.b32.xlu0 %v1393, 19
      %v1486 = vpop.permute.xlu0 %1485
      %1487 = vrot.lane.b32.xlu0 %v1390, 19
      %v1488 = vpop.permute.xlu0 %1487
      %1489 = vrot.lane.b32.xlu0 %v1395, 19
      %v1490 = vpop.permute.xlu0 %1489
      %1491 = vrot.lane.b32.xlu0 %v1400, 19
      %v1492 = vpop.permute.xlu0 %1491
      %1493 = vrot.lane.b32.xlu0 %v1401, 19
      %v1494 = vpop.permute.xlu0 %1493
      %1495 = vrot.lane.b32.xlu0 %v1399, 19
      %v1496 = vpop.permute.xlu0 %1495
      %1497 = vrot.lane.b32.xlu0 %v1407, 19
      %v1498 = vpop.permute.xlu0 %1497
      %1499 = vrot.lane.b32.xlu0 %v1414, 19
      %v1500 = vpop.permute.xlu0 %1499
      %1501 = vrot.lane.b32.xlu0 %v1415, 19
      %v1502 = vpop.permute.xlu0 %1501
      %1503 = vrot.lane.b32.xlu0 %v1416, 19
      %v1504 = vpop.permute.xlu0 %1503
      %1505 = vrot.lane.b32.xlu0 %v1418, 19
      %v1506 = vpop.permute.xlu0 %1505
      %1507 = vrot.lane.b32.xlu0 %v1425, 19
      %v1508 = vpop.permute.xlu0 %1507
      %1509 = vrot.lane.b32.xlu0 %v1426, 19
      %v1510 = vpop.permute.xlu0 %1509
      %1511 = vrot.lane.b32.xlu0 %v1427, 19
      %v1512 = vpop.permute.xlu0 %1511
      %1513 = vrot.lane.b32.xlu0 %v1429, 19
      %v1514 = vpop.permute.xlu0 %1513
      %1515 = vrot.lane.b32.xlu0 %v1436, 19
      %v1516 = vpop.permute.xlu0 %1515
      %1517 = vrot.lane.b32.xlu0 %v1437, 19
      %v1518 = vpop.permute.xlu0 %1517
      %1519 = vrot.lane.b32.xlu0 %v1438, 19
      %v1520 = vpop.permute.xlu0 %1519
      %1521 = vrot.lane.b32.xlu0 %v1440, 19
      %v1522 = vpop.permute.xlu0 %1521
      %1523 = vrot.lane.b32.xlu0 %v1447, 19
      %v1524 = vpop.permute.xlu0 %1523
      %1525 = vrot.lane.b32.xlu0 %v1448, 19
      %v1526 = vpop.permute.xlu0 %1525
      %1527 = vrot.lane.b32.xlu0 %v1449, 19
      %v1528 = vpop.permute.xlu0 %1527
      %v1529 = vsel %vm739, %v1458, %v1460
      %v1530 = vsel %vm739, %v1460, %v1462
      %v1531 = vsel %vm739, %v1462, %v1464
      %v1532 = vsel %vm739, %v1466, %v1468
      %v1533 = vsel %vm739, %v1468, %v1470
      %v1534 = vsel %vm739, %v1470, %v1472
      %v1535 = vsel %vm739, %v1474, %v1476
      %v1536 = vsel %vm739, %v1476, %v1478
      %v1537 = vsel %vm739, %v1478, %v1480
      %v1538 = vsel %vm739, %v1482, %v1484
      %v1539 = vsel %vm739, %v1484, %v1486
      %v1540 = vsel %vm739, %v1486, %v1488
      %v1541 = vsel %vm739, %v1490, %v1492
      %v1542 = vsel %vm739, %v1492, %v1494
      %v1543 = vsel %vm739, %v1494, %v1496
      %v1544 = vsel %vm739, %v1498, %v1500
      %v1545 = vsel %vm739, %v1500, %v1502
      %v1546 = vsel %vm739, %v1502, %v1504
      %v1547 = vsel %vm739, %v1506, %v1508
      %v1548 = vsel %vm739, %v1508, %v1510
      %v1549 = vsel %vm739, %v1510, %v1512
      %v1550 = vsel %vm739, %v1514, %v1516
      %v1551 = vsel %vm739, %v1516, %v1518
      %v1552 = vsel %vm739, %v1518, %v1520
      %v1553 = vsel %vm739, %v1522, %v1524
      %v1554 = vsel %vm739, %v1524, %v1526
      %v1555 = vsel %vm739, %v1526, %v1528
      %v1584 = vsel %vm1175, %v1450, 0
      %1586 = vmatprep.subr.mxu0 0.0
      %1587 = vmatpush1.msra.mxu0 0.0
      %1588 = vmatprep.subr.mxu0 0.0
      %1589 = vmatpush1.msra.mxu0 0.0
      %1590 = vmatprep.subr.mxu0 0.0
      %1591 = vmatpush1.msra.mxu0 0.0
      %1592 = vmatprep.subr.mxu0 0.0
      %1593 = vmatpush1.msra.mxu0 0.0
      %1594 = vmatprep.subr.mxu0 0.0
      %1595 = vmatpush1.msra.mxu0 0.0
      %1596 = vmatprep.subr.mxu0 0.0
      %1597 = vmatpush1.msra.mxu0 0.0
      %1598 = vmatprep.subr.mxu0 0.0
      %1599 = vmatpush1.msra.mxu0 0.0
      %1600 = vmatprep.subr.mxu0 %v1554
      %1601 = vmatpush1.msra.mxu0 %v1553
      %1602 = vmatprep.subr.mxu0 %v1551
      %1603 = vmatpush1.msra.mxu0 %v1550
      %1604 = vmatprep.subr.mxu0 %v1548
      %1605 = vmatpush1.msra.mxu0 %v1547
      %1606 = vmatprep.subr.mxu0 %v1545
      %1607 = vmatpush1.msra.mxu0 %v1544
      %1608 = vmatprep.subr.mxu0 %v1542
      %1609 = vmatpush1.msra.mxu0 %v1541
      %1610 = vmatprep.subr.mxu0 %v1539
      %1611 = vmatpush1.msra.mxu0 %v1538
      %1612 = vmatprep.subr.mxu0 %v1536
      %1613 = vmatpush1.msra.mxu0 %v1535
      %1614 = vmatprep.subr.mxu0 %v1533
      %1615 = vmatpush1.msra.mxu0 %v1532
      %1616 = vmatprep.subr.mxu0 %v1530
      %1617 = vmatpush1.msra.mxu0 %v1529
      %1618 = vmatprep.subr.mxu0 0.0
      %1619 = vmatpush2.msra.mxu0 0.0
      %1620 = vmatprep.subr.mxu0 0.0
      %1621 = vmatpush2.msra.mxu0 0.0
      %1622 = vmatprep.subr.mxu0 0.0
      %1623 = vmatpush2.msra.mxu0 0.0
      %1624 = vmatprep.subr.mxu0 0.0
      %1625 = vmatpush2.msra.mxu0 0.0
      %1626 = vmatprep.subr.mxu0 0.0
      %1627 = vmatpush2.msra.mxu0 0.0
      %1628 = vmatprep.subr.mxu0 0.0
      %1629 = vmatpush2.msra.mxu0 0.0
      %1630 = vmatprep.subr.mxu0 0.0
      %1631 = vmatpush2.msra.mxu0 0.0
      %1632 = vmatprep.subr.mxu0 0.0
      %1633 = vmatpush2.msra.mxu0 0.0
      %1634 = vmatprep.subr.mxu0 0.0
      %1635 = vmatpush2.msra.mxu0 0.0
      %1636 = vmatprep.subr.mxu0 0.0
      %1637 = vmatpush2.msra.mxu0 0.0
      %1638 = vmatprep.subr.mxu0 0.0
      %1639 = vmatpush2.msra.mxu0 0.0
      %1640 = vmatprep.subr.mxu0 0.0
      %1641 = vmatpush2.msra.mxu0 0.0
      %1642 = vmatprep.subr.mxu0 0.0
      %1643 = vmatpush2.msra.mxu0 0.0
      %1644 = vmatprep.subr.mxu0 0.0
      %1645 = vmatpush2.msra.mxu0 0.0
      %1646 = vmatprep.subr.mxu0 0.0
      %1647 = vmatpush2.msra.mxu0 0.0
      %1648 = vmatprep.subr.mxu0 0.0
      %1649 = vmatpush2.msra.mxu0 0.0
      %1650 = vmatprep.mubr.f32.mxu0 0.0
      %1651 = vmatmul.mubr.f32.gmra.mxu0 %v1584
      %v1652 = vpop.f32.mrf.mxu0
      %v1653 = vadd.f32 %v1455, %v1652
      %v1654 = vpop.f32.mrf.mxu0
      %v1655 = vadd.f32 %v1455, %v1654
      %1656 = vdwg.mxu0
      %1657 = vmatprep.subr.mxu0 0.0
      %1658 = vmatpush1.msra.mxu0 0.0
      %1659 = vmatprep.subr.mxu0 0.0
      %1660 = vmatpush1.msra.mxu0 0.0
      %1661 = vmatprep.subr.mxu0 0.0
      %1662 = vmatpush1.msra.mxu0 0.0
      %1663 = vmatprep.subr.mxu0 0.0
      %1664 = vmatpush1.msra.mxu0 0.0
      %1665 = vmatprep.subr.mxu0 0.0
      %1666 = vmatpush1.msra.mxu0 0.0
      %1667 = vmatprep.subr.mxu0 0.0
      %1668 = vmatpush1.msra.mxu0 0.0
      %1669 = vmatprep.subr.mxu0 0.0
      %1670 = vmatpush1.msra.mxu0 0.0
      %1671 = vmatprep.subr.mxu0 0.0
      %1672 = vmatpush1.msra.mxu0 %v1555
      %1673 = vmatprep.subr.mxu0 0.0
      %1674 = vmatpush1.msra.mxu0 %v1552
      %1675 = vmatprep.subr.mxu0 0.0
      %1676 = vmatpush1.msra.mxu0 %v1549
      %1677 = vmatprep.subr.mxu0 0.0
      %1678 = vmatpush1.msra.mxu0 %v1546
      %1679 = vmatprep.subr.mxu0 0.0
      %1680 = vmatpush1.msra.mxu0 %v1543
      %1681 = vmatprep.subr.mxu0 0.0
      %1682 = vmatpush1.msra.mxu0 %v1540
      %1683 = vmatprep.subr.mxu0 0.0
      %1684 = vmatpush1.msra.mxu0 %v1537
      %1685 = vmatprep.subr.mxu0 0.0
      %1686 = vmatpush1.msra.mxu0 %v1534
      %1687 = vmatprep.subr.mxu0 0.0
      %1688 = vmatpush1.msra.mxu0 %v1531
      %1689 = vmatprep.subr.mxu0 0.0
      %1690 = vmatpush2.msra.mxu0 0.0
      %1691 = vmatprep.subr.mxu0 0.0
      %1692 = vmatpush2.msra.mxu0 0.0
      %1693 = vmatprep.subr.mxu0 0.0
      %1694 = vmatpush2.msra.mxu0 0.0
      %1695 = vmatprep.subr.mxu0 0.0
      %1696 = vmatpush2.msra.mxu0 0.0
      %1697 = vmatprep.subr.mxu0 0.0
      %1698 = vmatpush2.msra.mxu0 0.0
      %1699 = vmatprep.subr.mxu0 0.0
      %1700 = vmatpush2.msra.mxu0 0.0
      %1701 = vmatprep.subr.mxu0 0.0
      %1702 = vmatpush2.msra.mxu0 0.0
      %1703 = vmatprep.subr.mxu0 0.0
      %1704 = vmatpush2.msra.mxu0 0.0
      %1705 = vmatprep.subr.mxu0 0.0
      %1706 = vmatpush2.msra.mxu0 0.0
      %1707 = vmatprep.subr.mxu0 0.0
      %1708 = vmatpush2.msra.mxu0 0.0
      %1709 = vmatprep.subr.mxu0 0.0
      %1710 = vmatpush2.msra.mxu0 0.0
      %1711 = vmatprep.subr.mxu0 0.0
      %1712 = vmatpush2.msra.mxu0 0.0
      %1713 = vmatprep.subr.mxu0 0.0
      %1714 = vmatpush2.msra.mxu0 0.0
      %1715 = vmatprep.subr.mxu0 0.0
      %1716 = vmatpush2.msra.mxu0 0.0
      %1717 = vmatprep.subr.mxu0 0.0
      %1718 = vmatpush2.msra.mxu0 0.0
      %1719 = vmatprep.subr.mxu0 0.0
      %1720 = vmatpush2.msra.mxu0 0.0
      %1721 = vmatprep.mubr.f32.mxu0 0.0
      %1722 = vmatmul.mubr.f32.gmra.mxu0 %v1584
      %v1723 = vpop.f32.mrf.mxu0
      %v1724 = vadd.f32 %v1455, %v1723
      %v1725 = vpop.f32.mrf.mxu0
      %1726 = vdwg.mxu0
      %v1727 = vmul.f32 %v1653, %v912
      %v1728 = vmul.f32 %v1655, %v916
      %v1729 = vmul.f32 %v1724, %v920
      %v1730 = vadd.f32 %v1727, %v927
      %v1731 = vadd.f32 %v1728, %v928
      %v1732 = vadd.f32 %v1729, %v929
      %1733 = vst [vmem:[%s413 + $0x18] sm:$0xff] %v1730
      %1734 = vst [vmem:[%s413 + $0x20] sm:$0xff] %v1731
      %1735 = vst [vmem:[%s413 + $0x28] sm:$0xff] %v1732
      %p1736 = scmp.lt.s32.totalorder %s23, 1
      %s1737 = scalar_select %p1736, %s23, 1
      %s1738 = smul.addr %s1737, 6
      %s1739 = smul.addr %s1738, 8
      %s1740 = scalar_lea.vmem %s12, %s1739
      // Predicated region
      $region69: #{channel_increase_block.1} parent=67 // pred_check
        %p1741 = pneg %p298
      $region70: #{channel_increase_block.1} parent=67 // pred_check_branch
        %1743 = sbr.rel (%p1741) target = $region72
      $region71: #{channel_increase_block.1} parent=67 // pred_region
        _
      $region72: #{channel_increase_block.1} parent=67 // pred_fallthru
        _
    $region68: #{channel_increase_block.1} parent=5 // pred_fallthru
      _
    %p1744 = scmp.le.s32.totalorder 2, %s18
    // Predicated region
    $region73: #{channel_increase_block.1} parent=5 // pred_check
      %p1745 = pneg %p1744
    $region74: #{channel_increase_block.1} parent=5 // pred_check_branch
      %1747 = sbr.rel (%p1745) target = $region76
    $region75: #{channel_increase_block.1} parent=5 // pred_region
      %s1748 = ssub.s32 %s18, 2
      // Predicated region
      $region77: #{channel_increase_block.1} parent=75 // pred_check
        %p1749 = pneg %p304
      $region78: #{channel_increase_block.1} parent=75 // pred_check_branch
        %1751 = sbr.rel (%p1749) target = $region80
      $region79: #{channel_increase_block.1} parent=75 // pred_region
        %p1752 = scmp.lt.s32.totalorder %s24, 1
        %s1753 = scalar_select %p1752, %s24, 1
        %s1754 = smul.addr %s1753, 6
        %s1755 = smul.addr %s1754, 8
        %s1756 = scalar_lea.vmem %s12, %s1755
      $region80: #{channel_increase_block.1} parent=75 // pred_fallthru
        _
    $region76: #{channel_increase_block.1} parent=5 // pred_fallthru
      _
  $region6: #{channel_increase_block.1} parent=0 // loop_footer
    %s22 = sadd.s32 1, %s18
  $region7: #{channel_increase_block.1} parent=0 // loop_footer_branch
    %17 = sbr.rel target = $region3
  $region8: #{channel_increase_block.1} parent=0 // loop_exit
    _

</llo_original>
